<compile_context>
chip_gen: v7x
topology: tpu7x:2x2x1
jax: 0.10.0
libtpu: 0.0.40
codegen_flags: <defaults>
</compile_context>

<pallas_src>
import functools

import jax
import jax.numpy as jnp
from jax import lax
from jax.experimental import pallas as pl
from jax.experimental.pallas import tpu as pltpu


LN_EPS = 1e-12  # the spec module's TF-style LayerNorm default (eps inside sqrt)


# ---------------------------------------------------------------------------
# Kernel: one ResidualAttentionBlock per grid step along the layer axis.
# ---------------------------------------------------------------------------
def _resblock_kernel(x_ref,
                     inw_ref, inb_ref,     # LN1-folded in_proj  (D,3D) bf16 / (1,3D) f32
                     ow_ref, ob_ref,       # attn out_proj       (D,D)  bf16 / (1,D)  f32
                     fcw_ref, fcb_ref,     # LN2-folded c_fc     (D,4D) bf16 / (1,4D) f32
                     pjw_ref, pjb_ref,     # mlp  c_proj         (4D,D) bf16 / (1,D)  f32
                     o_ref,
                     res_ref,
                     *, n_head):
    layer = pl.program_id(1)

    # Residual stream lives in an f32 VMEM scratch across the layer grid axis.
    @pl.when(layer == 0)
    def _():
        res_ref[...] = x_ref[...].astype(jnp.float32)

    x = res_ref[...]                            # (Bt, S, D) f32
    Bt, S, D = x.shape
    T = Bt * S
    H = n_head
    hd = D // H
    scale = 1.0 / (float(hd) ** 0.5)

    def normalize(v):
        # gamma/beta of this LN were folded into the following matmul at prep time.
        u = jnp.mean(v, axis=-1, keepdims=True)
        c = v - u
        s = jnp.mean(c * c, axis=-1, keepdims=True)
        return c * lax.rsqrt(s + LN_EPS)

    # ---- LN1 + multi-head self-attention (heads folded onto batch axis) ----
    h = normalize(x).astype(jnp.bfloat16)
    qkv = (jnp.dot(h.reshape(T, D), inw_ref[...],
                   preferred_element_type=jnp.float32) + inb_ref[...])        # (T,3D) f32
    qkv = qkv.astype(jnp.bfloat16).reshape(Bt, S, 3 * D)

    def fold(col0):  # (Bt,S,·) head-major fold -> (H*Bt, S, hd), bf16
        return jnp.concatenate(
            [qkv[:, :, col0 + i * hd: col0 + (i + 1) * hd] for i in range(H)],
            axis=0)

    qb, kb, vb = fold(0), fold(D), fold(2 * D)

    # bf16 operands, f32 accumulation (full-rate MXU on v5e/v6e/v7x).
    sc = jnp.einsum('bqd,bkd->bqk', qb, kb,
                    preferred_element_type=jnp.float32) * scale               # (HB,S,S)
    sc = sc - jnp.max(sc, axis=-1, keepdims=True)
    p = jnp.exp(sc)
    # NOTE: approx reciprocal (EUP) adds ~1e-3 rel error per layer; switch to an
    # exact divide if running very deep stacks with tight tolerances.
    p = p * pl.reciprocal(jnp.sum(p, axis=-1, keepdims=True), approx=True)
    ctx = jnp.einsum('bqk,bkd->bqd', p.astype(jnp.bfloat16), vb,
                     preferred_element_type=jnp.float32)                      # (HB,S,hd)
    ctx = ctx.astype(jnp.bfloat16)
    ctx = jnp.concatenate([ctx[i * Bt:(i + 1) * Bt] for i in range(H)],
                          axis=-1)                                            # (Bt,S,D)

    attn = jnp.dot(ctx.reshape(T, D), ow_ref[...],
                   preferred_element_type=jnp.float32) + ob_ref[...]
    x = x + attn.reshape(Bt, S, D)

    # ---- LN2 + MLP (Linear -> QuickGELU -> Linear) --------------------------
    h2 = normalize(x).astype(jnp.bfloat16)
    fc = (jnp.dot(h2.reshape(T, D), fcw_ref[...],
                  preferred_element_type=jnp.float32) + fcb_ref[...])         # (T,4D) f32
    fc = fc.astype(jnp.bfloat16)                 # keep the big (T,4D) buffer bf16
    fc = fc * jax.nn.sigmoid(1.702 * fc)         # QuickGELU in bf16 (bf16 EUP/VPU)
    mlp = jnp.dot(fc, pjw_ref[...],
                  preferred_element_type=jnp.float32) + pjb_ref[...]          # (T,D)
    x = x + mlp.reshape(Bt, S, D)

    res_ref[...] = x

    @pl.when(layer == pl.num_programs(1) - 1)
    def _():
        o_ref[...] = x.astype(o_ref.dtype)


# ---------------------------------------------------------------------------
# Wrapper
# ---------------------------------------------------------------------------
def _vmem_capacity_bytes():
    try:
        cap = getattr(pltpu.get_tpu_info(), 'vmem_capacity_bytes', None)
        if cap:
            return int(cap)
    except Exception:
        pass
    return 64 << 20  # conservative fallback (v7x per-TensorCore VMEM)


def _pick_batch_tiles(B, S):
    # Feed the second TensorCore (v7x megacore) only when each half-batch keeps
    # enough rows to amortize the (then duplicated) per-core weight stream;
    # otherwise a single tile maximizes rows per weight DMA.
    return 2 if (B % 2 == 0 and (B // 2) * S >= 1024) else 1


def temporal_transformer(x_sbd, params, n_head, *, batch_tiles=None):
    """x_sbd: (n_seg, b, width) — same axis convention as the PyTorch module."""
    S, B, D = x_sbd.shape
    L = params['in_w'].shape[0]
    assert D % n_head == 0, "width must be divisible by heads"

    # (S,B,D) -> (B,S,D) once outside the kernel; attention then batches over a
    # leading axis (Mosaic-friendly 3-D leading-batch matmuls). Kept f32.
    x = jnp.transpose(x_sbd, (1, 0, 2)).astype(jnp.float32)

    nb = batch_tiles if batch_tiles is not None else _pick_batch_tiles(B, S)
    assert B % nb == 0
    bt = B // nb
    T = bt * S

    in_act_spec = pl.BlockSpec((bt, S, D), lambda b, l: (b, 0, 0))
    out_act_spec = pl.BlockSpec((bt, S, D), lambda b, l: (b, 0, 0))
    wspec = lambda d0, d1: pl.BlockSpec((pl.Squeezed(), d0, d1),
                                        lambda b, l: (l, 0, 0))

    # --- generation-aware VMEM budget ------------------------------------
    weights = 2 * 2 * (12 * D * D) + 2 * 4 * (9 * D)   # double-buffered bf16 W + f32 b
    io = 2 * 2 * T * D * 4                             # aliased in/out blocks, f32
    resid = T * D * 4                                  # residual scratch
    acts = (T * 3 * D * 2 + 3 * T * D * 2              # qkv + folded q/k/v (bf16)
            + n_head * bt * S * S * 6                  # scores f32 + probs bf16
            + T * D * 6                                # ctx f32 + bf16
            + T * 4 * D * 6                            # fc f32 + bf16
            + 4 * T * D * 4)                           # LN temps / attn / mlp f32
    need = weights + io + resid + acts + (6 << 20)     # + Mosaic internal slack
    cap = _vmem_capacity_bytes()
    vmem_limit = int(min(max(need, 32 << 20), int(0.85 * cap)))

    out = pl.pallas_call(
        functools.partial(_resblock_kernel, n_head=n_head),
        grid=(nb, L),
        in_specs=[
            in_act_spec,                          # x
            wspec(D, 3 * D), wspec(1, 3 * D),     # in_proj  (LN1 folded)
            wspec(D, D), wspec(1, D),             # out_proj
            wspec(D, 4 * D), wspec(1, 4 * D),     # c_fc     (LN2 folded)
            wspec(4 * D, D), wspec(1, D),         # c_proj
        ],
        out_specs=out_act_spec,
        out_shape=jax.ShapeDtypeStruct((B, S, D), jnp.float32),
        scratch_shapes=[pltpu.VMEM((bt, S, D), jnp.float32)],  # residual carry
        input_output_aliases={0: 0},
        compiler_params=pltpu.CompilerParams(
            dimension_semantics=("parallel", "arbitrary"),
            vmem_limit_bytes=vmem_limit),
    )(x,
      params['in_w'], params['in_b'],
      params['out_w'], params['out_b'],
      params['fc_w'], params['fc_b'],
      params['pj_w'], params['pj_b'])

    return jnp.transpose(out, (1, 0, 2))          # back to (n_seg, b, width)


# ---------------------------------------------------------------------------
# Parameter construction / preparation
# ---------------------------------------------------------------------------
def init_params(key, width, layers):
    """Deterministic synthetic parameters in PyTorch (out, in) layout, f32."""
    D = width
    ks = jax.random.split(key, 8)
    nrm = lambda k, shape: (0.02 * jax.random.normal(k, shape)).astype(jnp.float32)
    return {
        'ln1_w': jnp.ones((layers, 1, D), jnp.float32),
        'ln1_b': jnp.zeros((layers, 1, D), jnp.float32),
        'ln2_w': jnp.ones((layers, 1, D), jnp.float32),
        'ln2_b': jnp.zeros((layers, 1, D), jnp.float32),
        'in_w':  nrm(ks[0], (layers, 3 * D, D)),   # MHA in_proj_weight (3D, D)
        'in_b':  nrm(ks[1], (layers, 1, 3 * D)),
        'out_w': nrm(ks[2], (layers, D, D)),       # MHA out_proj.weight (D, D)
        'out_b': nrm(ks[3], (layers, 1, D)),
        'fc_w':  nrm(ks[4], (layers, 4 * D, D)),   # mlp.c_fc.weight (4D, D)
        'fc_b':  nrm(ks[5], (layers, 1, 4 * D)),
        'pj_w':  nrm(ks[6], (layers, D, 4 * D)),   # mlp.c_proj.weight (D, 4D)
        'pj_b':  nrm(ks[7], (layers, 1, D)),
    }


def prepare_params(p):
    """Pre-transpose projection weights to (in, out), cast to bf16, and fold the
    preceding LayerNorm gamma/beta into in_proj / c_fc (exact transform):
        (g * xhat + beta) @ W + b  ==  xhat @ (diag(g) W) + (beta @ W + b)
    Biases stay f32.
    """
    t = lambda w: jnp.swapaxes(w, 1, 2)            # (L,out,in) -> (L,in,out)

    def fold_ln(lnw, lnb, w, b):
        wt = t(w)                                   # (L, in, out) f32
        w_f = wt * jnp.swapaxes(lnw, 1, 2)          # scale input-row d by gamma_d
        b_f = b + jnp.einsum('lri,lio->lro', lnb, wt)
        return w_f.astype(jnp.bfloat16), b_f.astype(jnp.float32)

    in_w, in_b = fold_ln(p['ln1_w'], p['ln1_b'], p['in_w'], p['in_b'])
    fc_w, fc_b = fold_ln(p['ln2_w'], p['ln2_b'], p['fc_w'], p['fc_b'])
    return {
        'in_w': in_w, 'in_b': in_b,
        'out_w': t(p['out_w']).astype(jnp.bfloat16), 'out_b': p['out_b'],
        'fc_w': fc_w, 'fc_b': fc_b,
        'pj_w': t(p['pj_w']).astype(jnp.bfloat16), 'pj_b': p['pj_b'],
    }


# ---------------------------------------------------------------------------
# Pure-JAX reference (PyTorch forward semantics; weights rounded to bf16 like
# the kernel, activations f32)
# ---------------------------------------------------------------------------
def _layernorm_ref(v, w, b):
    u = jnp.mean(v, axis=-1, keepdims=True)
    s = jnp.mean((v - u) ** 2, axis=-1, keepdims=True)
    return w * ((v - u) * lax.rsqrt(s + LN_EPS)) + b


def reference(x_sbd, raw, heads):
    S, B, D = x_sbd.shape
    hd = D // heads
    L = raw['in_w'].shape[0]
    w16 = lambda a: a.astype(jnp.bfloat16).astype(jnp.float32)
    x = jnp.transpose(x_sbd, (1, 0, 2)).astype(jnp.float32)
    for l in range(L):
        h = _layernorm_ref(x, raw['ln1_w'][l], raw['ln1_b'][l])
        qkv = h @ w16(raw['in_w'][l]).T + raw['in_b'][l]
        q, k, v = jnp.split(qkv, 3, axis=-1)
        q = q.reshape(B, S, heads, hd)
        k = k.reshape(B, S, heads, hd)
        v = v.reshape(B, S, heads, hd)
        sc = jnp.einsum('bqhd,bkhd->bhqk', q, k) / jnp.sqrt(float(hd))
        p = jax.nn.softmax(sc, axis=-1)
        ctx = jnp.einsum('bhqk,bkhd->bqhd', p, v).reshape(B, S, D)
        x = x + ctx @ w16(raw['out_w'][l]).T + raw['out_b'][l]
        h2 = _layernorm_ref(x, raw['ln2_w'][l], raw['ln2_b'][l])
        fc = h2 @ w16(raw['fc_w'][l]).T + raw['fc_b'][l]
        fc = fc * jax.nn.sigmoid(1.702 * fc)
        x = x + fc @ w16(raw['pj_w'][l]).T + raw['pj_b'][l]
    return jnp.transpose(x, (1, 0, 2))


if __name__ == "__main__":
    width, layers, heads = 32, 2, 4
    n_seg, b = 8, 2                      # (seq, batch) in the PyTorch convention

    key = jax.random.PRNGKey(0)
    kx, kp = jax.random.split(key)
    x = jax.random.normal(kx, (n_seg, b, width), dtype=jnp.float32)
    raw = init_params(kp, width, layers)
    params = prepare_params(raw)

    ref = reference(x, raw, heads)       # computed before the (aliased) kernel run
    out = jax.block_until_ready(temporal_transformer(x, params, heads))

    assert out.shape == (n_seg, b, width)
    err = float(jnp.max(jnp.abs(out - ref)))
    assert err < 2e-3, err
    print("KERNEL_OK")
</pallas_src>

<mosaic_0001>
module attributes {stable_mosaic.version = 11 : i64} {
  func.func @_resblock_kernel(%arg0: i32, %arg1: i32, %arg2: memref<2x8x32xf32, #tpu.memory_space<vmem>>, %arg3: memref<1x32x96xbf16, #tpu.memory_space<vmem>>, %arg4: memref<1x1x96xf32, #tpu.memory_space<vmem>>, %arg5: memref<1x32x32xbf16, #tpu.memory_space<vmem>>, %arg6: memref<1x1x32xf32, #tpu.memory_space<vmem>>, %arg7: memref<1x32x128xbf16, #tpu.memory_space<vmem>>, %arg8: memref<1x1x128xf32, #tpu.memory_space<vmem>>, %arg9: memref<1x128x32xbf16, #tpu.memory_space<vmem>>, %arg10: memref<1x1x32xf32, #tpu.memory_space<vmem>>, %arg11: memref<2x8x32xf32, #tpu.memory_space<vmem>>, %arg12: memref<2x8x32xf32, #tpu.memory_space<vmem>>) attributes {dimension_semantics = [#tpu.dimension_semantics<parallel>, #tpu.dimension_semantics<arbitrary>], iteration_bounds = array<i64: 1, 2>, scalar_prefetch = 0 : i64, scratch_operands = 1 : i64, tpu.core_type = #tpu.core_type<tc>, window_params = [{transform_indices = @transform_0, window_bounds = array<i64: 2, 8, 32>}, {transform_indices = @transform_1, window_bounds = array<i64: 1, 32, 96>}, {transform_indices = @transform_2, window_bounds = array<i64: 1, 1, 96>}, {transform_indices = @transform_3, window_bounds = array<i64: 1, 32, 32>}, {transform_indices = @transform_4, window_bounds = array<i64: 1, 1, 32>}, {transform_indices = @transform_5, window_bounds = array<i64: 1, 32, 128>}, {transform_indices = @transform_6, window_bounds = array<i64: 1, 1, 128>}, {transform_indices = @transform_7, window_bounds = array<i64: 1, 128, 32>}, {transform_indices = @transform_8, window_bounds = array<i64: 1, 1, 32>}, {transform_indices = @transform_9, window_bounds = array<i64: 2, 8, 32>}]} {
    %c0_i32 = arith.constant 0 : i32
    %0 = arith.cmpi eq, %arg1, %c0_i32 : i32
    %1 = arith.extui %0 : i1 to i32
    %c0_i32_0 = arith.constant 0 : i32
    %2 = arith.cmpi ne, %1, %c0_i32_0 : i32
    scf.if %2 {
      %c0_51 = arith.constant 0 : index
      %c0_52 = arith.constant 0 : index
      %c0_53 = arith.constant 0 : index
      %124 = vector.load %arg2[%c0_51, %c0_52, %c0_53] : memref<2x8x32xf32, #tpu.memory_space<vmem>>, vector<2x8x32xf32>
      %c0_54 = arith.constant 0 : index
      %c0_55 = arith.constant 0 : index
      %c0_56 = arith.constant 0 : index
      %125 = vector.load %arg12[%c0_54, %c0_55, %c0_56] : memref<2x8x32xf32, #tpu.memory_space<vmem>>, vector<2x8x32xf32>
      tpu.vector_store %arg12[%c0_54, %c0_55, %c0_56], %124 {strides = array<i32>} : memref<2x8x32xf32, #tpu.memory_space<vmem>>, vector<2x8x32xf32>,
    } else {
    }
    %c0 = arith.constant 0 : index
    %c0_1 = arith.constant 0 : index
    %c0_2 = arith.constant 0 : index
    %3 = vector.load %arg12[%c0, %c0_1, %c0_2] : memref<2x8x32xf32, #tpu.memory_space<vmem>>, vector<2x8x32xf32>
    %cst = arith.constant dense<0.000000e+00> : vector<2x8xf32>
    %4 = vector.multi_reduction <add>, %3, %cst [2] : vector<2x8x32xf32> to vector<2x8xf32>
    %5 = vector.shape_cast %4 : vector<2x8xf32> to vector<2x8x1xf32>
    %cst_3 = arith.constant 3.200000e+01 : f32
    %6 = vector.broadcast %cst_3 : f32 to vector<2x8x1xf32>
    %7 = arith.divf %5, %6 : vector<2x8x1xf32>
    %8 = vector.broadcast %7 : vector<2x8x1xf32> to vector<2x8x32xf32>
    %9 = arith.subf %3, %8 : vector<2x8x32xf32>
    %10 = arith.mulf %9, %9 : vector<2x8x32xf32>
    %cst_4 = arith.constant dense<0.000000e+00> : vector<2x8xf32>
    %11 = vector.multi_reduction <add>, %10, %cst_4 [2] : vector<2x8x32xf32> to vector<2x8xf32>
    %12 = vector.shape_cast %11 : vector<2x8xf32> to vector<2x8x1xf32>
    %cst_5 = arith.constant 3.200000e+01 : f32
    %13 = vector.broadcast %cst_5 : f32 to vector<2x8x1xf32>
    %14 = arith.divf %12, %13 : vector<2x8x1xf32>
    %cst_6 = arith.constant 9.99999996E-13 : f32
    %15 = vector.broadcast %cst_6 : f32 to vector<2x8x1xf32>
    %16 = arith.addf %14, %15 : vector<2x8x1xf32>
    %17 = math.rsqrt %16 : vector<2x8x1xf32>
    %18 = vector.broadcast %17 : vector<2x8x1xf32> to vector<2x8x32xf32>
    %19 = arith.mulf %9, %18 : vector<2x8x32xf32>
    %20 = arith.truncf %19 : vector<2x8x32xf32> to vector<2x8x32xbf16>
    %21 = vector.shape_cast %20 : vector<2x8x32xbf16> to vector<16x32xbf16>
    %c0_7 = arith.constant 0 : index
    %c0_8 = arith.constant 0 : index
    %c0_9 = arith.constant 0 : index
    %22 = vector.load %arg3[%c0_7, %c0_8, %c0_9] : memref<1x32x96xbf16, #tpu.memory_space<vmem>>, vector<1x32x96xbf16>
    %23 = vector.shape_cast %22 : vector<1x32x96xbf16> to vector<32x96xbf16>
    %cst_10 = arith.constant dense<0.000000e+00> : vector<16x96xf32>
    %24 = tpu.matmul %21, %23, %cst_10 {dimension_numbers = #tpu.dot_dimension_numbers<[1], [0], [0], [1], [0, 0, 1, 1], [], []>} : vector<16x32xbf16>, vector<32x96xbf16>, vector<16x96xf32> -> vector<16x96xf32>
    %c0_11 = arith.constant 0 : index
    %c0_12 = arith.constant 0 : index
    %c0_13 = arith.constant 0 : index
    %25 = vector.load %arg4[%c0_11, %c0_12, %c0_13] : memref<1x1x96xf32, #tpu.memory_space<vmem>>, vector<1x1x96xf32>
    %26 = vector.shape_cast %25 : vector<1x1x96xf32> to vector<1x96xf32>
    %27 = vector.broadcast %26 : vector<1x96xf32> to vector<16x96xf32>
    %28 = arith.addf %24, %27 : vector<16x96xf32>
    %29 = arith.truncf %28 : vector<16x96xf32> to vector<16x96xbf16>
    %30 = vector.shape_cast %29 : vector<16x96xbf16> to vector<2x8x96xbf16>
    %31 = vector.extract_strided_slice %30 {offsets = [0, 0, 0], sizes = [2, 8, 8], strides = [1, 1, 1]} : vector<2x8x96xbf16> to vector<2x8x8xbf16>
    %32 = vector.extract_strided_slice %30 {offsets = [0, 0, 8], sizes = [2, 8, 8], strides = [1, 1, 1]} : vector<2x8x96xbf16> to vector<2x8x8xbf16>
    %33 = vector.extract_strided_slice %30 {offsets = [0, 0, 16], sizes = [2, 8, 8], strides = [1, 1, 1]} : vector<2x8x96xbf16> to vector<2x8x8xbf16>
    %34 = vector.extract_strided_slice %30 {offsets = [0, 0, 24], sizes = [2, 8, 8], strides = [1, 1, 1]} : vector<2x8x96xbf16> to vector<2x8x8xbf16>
    %35 = tpu.concatenate %31, %32, %33, %34 in 0 : vector<2x8x8xbf16>, vector<2x8x8xbf16>, vector<2x8x8xbf16>, vector<2x8x8xbf16> -> vector<8x8x8xbf16>
    %36 = vector.extract_strided_slice %30 {offsets = [0, 0, 32], sizes = [2, 8, 8], strides = [1, 1, 1]} : vector<2x8x96xbf16> to vector<2x8x8xbf16>
    %37 = vector.extract_strided_slice %30 {offsets = [0, 0, 40], sizes = [2, 8, 8], strides = [1, 1, 1]} : vector<2x8x96xbf16> to vector<2x8x8xbf16>
    %38 = vector.extract_strided_slice %30 {offsets = [0, 0, 48], sizes = [2, 8, 8], strides = [1, 1, 1]} : vector<2x8x96xbf16> to vector<2x8x8xbf16>
    %39 = vector.extract_strided_slice %30 {offsets = [0, 0, 56], sizes = [2, 8, 8], strides = [1, 1, 1]} : vector<2x8x96xbf16> to vector<2x8x8xbf16>
    %40 = tpu.concatenate %36, %37, %38, %39 in 0 : vector<2x8x8xbf16>, vector<2x8x8xbf16>, vector<2x8x8xbf16>, vector<2x8x8xbf16> -> vector<8x8x8xbf16>
    %41 = vector.extract_strided_slice %30 {offsets = [0, 0, 64], sizes = [2, 8, 8], strides = [1, 1, 1]} : vector<2x8x96xbf16> to vector<2x8x8xbf16>
    %42 = vector.extract_strided_slice %30 {offsets = [0, 0, 72], sizes = [2, 8, 8], strides = [1, 1, 1]} : vector<2x8x96xbf16> to vector<2x8x8xbf16>
    %43 = vector.extract_strided_slice %30 {offsets = [0, 0, 80], sizes = [2, 8, 8], strides = [1, 1, 1]} : vector<2x8x96xbf16> to vector<2x8x8xbf16>
    %44 = vector.extract_strided_slice %30 {offsets = [0, 0, 88], sizes = [2, 8, 8], strides = [1, 1, 1]} : vector<2x8x96xbf16> to vector<2x8x8xbf16>
    %45 = tpu.concatenate %41, %42, %43, %44 in 0 : vector<2x8x8xbf16>, vector<2x8x8xbf16>, vector<2x8x8xbf16>, vector<2x8x8xbf16> -> vector<8x8x8xbf16>
    "tpu.trace_start"() <{level = 10 : i32, message = "bqd,bkd->bqk"}> : () -> ()
    %cst_14 = arith.constant dense<0.000000e+00> : vector<8x8x8xf32>
    %46 = tpu.matmul %35, %40, %cst_14 {dimension_numbers = #tpu.dot_dimension_numbers<[2], [2], [1], [1], [0, 0, 0, 1, 1, 1], [0], [0]>} : vector<8x8x8xbf16>, vector<8x8x8xbf16>, vector<8x8x8xf32> -> vector<8x8x8xf32>
    "tpu.trace_stop"() : () -> ()
    %cst_15 = arith.constant 0.353553385 : f32
    %47 = vector.broadcast %cst_15 : f32 to vector<8x8x8xf32>
    %48 = arith.mulf %46, %47 : vector<8x8x8xf32>
    %cst_16 = arith.constant dense<0xFF800000> : vector<8x8xf32>
    %49 = vector.multi_reduction <maximumf>, %48, %cst_16 [2] : vector<8x8x8xf32> to vector<8x8xf32>
    %50 = vector.shape_cast %49 : vector<8x8xf32> to vector<8x8x1xf32>
    %51 = vector.broadcast %50 : vector<8x8x1xf32> to vector<8x8x8xf32>
    %52 = arith.subf %48, %51 : vector<8x8x8xf32>
    %53 = math.exp %52 : vector<8x8x8xf32>
    %cst_17 = arith.constant dense<0.000000e+00> : vector<8x8xf32>
    %54 = vector.multi_reduction <add>, %53, %cst_17 [2] : vector<8x8x8xf32> to vector<8x8xf32>
    %55 = vector.shape_cast %54 : vector<8x8xf32> to vector<8x8x1xf32>
    %56 = tpu.reciprocal %55 {approx = true} : vector<8x8x1xf32> -> vector<8x8x1xf32>
    %57 = vector.broadcast %56 : vector<8x8x1xf32> to vector<8x8x8xf32>
    %58 = arith.mulf %53, %57 : vector<8x8x8xf32>
    %59 = arith.truncf %58 : vector<8x8x8xf32> to vector<8x8x8xbf16>
    "tpu.trace_start"() <{level = 10 : i32, message = "bqk,bkd->bqd"}> : () -> ()
    %cst_18 = arith.constant dense<0.000000e+00> : vector<8x8x8xf32>
    %60 = tpu.matmul %59, %45, %cst_18 {dimension_numbers = #tpu.dot_dimension_numbers<[2], [1], [1], [2], [0, 0, 0, 1, 1, 2], [0], [0]>} : vector<8x8x8xbf16>, vector<8x8x8xbf16>, vector<8x8x8xf32> -> vector<8x8x8xf32>
    "tpu.trace_stop"() : () -> ()
    %61 = arith.truncf %60 : vector<8x8x8xf32> to vector<8x8x8xbf16>
    %62 = vector.extract_strided_slice %61 {offsets = [0, 0, 0], sizes = [2, 8, 8], strides = [1, 1, 1]} : vector<8x8x8xbf16> to vector<2x8x8xbf16>
    %63 = vector.extract_strided_slice %61 {offsets = [2, 0, 0], sizes = [2, 8, 8], strides = [1, 1, 1]} : vector<8x8x8xbf16> to vector<2x8x8xbf16>
    %64 = vector.extract_strided_slice %61 {offsets = [4, 0, 0], sizes = [2, 8, 8], strides = [1, 1, 1]} : vector<8x8x8xbf16> to vector<2x8x8xbf16>
    %65 = vector.extract_strided_slice %61 {offsets = [6, 0, 0], sizes = [2, 8, 8], strides = [1, 1, 1]} : vector<8x8x8xbf16> to vector<2x8x8xbf16>
    %66 = tpu.concatenate %62, %63, %64, %65 in 2 : vector<2x8x8xbf16>, vector<2x8x8xbf16>, vector<2x8x8xbf16>, vector<2x8x8xbf16> -> vector<2x8x32xbf16>
    %67 = vector.shape_cast %66 : vector<2x8x32xbf16> to vector<16x32xbf16>
    %c0_19 = arith.constant 0 : index
    %c0_20 = arith.constant 0 : index
    %c0_21 = arith.constant 0 : index
    %68 = vector.load %arg5[%c0_19, %c0_20, %c0_21] : memref<1x32x32xbf16, #tpu.memory_space<vmem>>, vector<1x32x32xbf16>
    %69 = vector.shape_cast %68 : vector<1x32x32xbf16> to vector<32x32xbf16>
    %cst_22 = arith.constant dense<0.000000e+00> : vector<16x32xf32>
    %70 = tpu.matmul %67, %69, %cst_22 {dimension_numbers = #tpu.dot_dimension_numbers<[1], [0], [0], [1], [0, 0, 1, 1], [], []>} : vector<16x32xbf16>, vector<32x32xbf16>, vector<16x32xf32> -> vector<16x32xf32>
    %c0_23 = arith.constant 0 : index
    %c0_24 = arith.constant 0 : index
    %c0_25 = arith.constant 0 : index
    %71 = vector.load %arg6[%c0_23, %c0_24, %c0_25] : memref<1x1x32xf32, #tpu.memory_space<vmem>>, vector<1x1x32xf32>
    %72 = vector.shape_cast %71 : vector<1x1x32xf32> to vector<1x32xf32>
    %73 = vector.broadcast %72 : vector<1x32xf32> to vector<16x32xf32>
    %74 = arith.addf %70, %73 : vector<16x32xf32>
    %75 = vector.shape_cast %74 : vector<16x32xf32> to vector<2x8x32xf32>
    %76 = arith.addf %3, %75 : vector<2x8x32xf32>
    %cst_26 = arith.constant dense<0.000000e+00> : vector<2x8xf32>
    %77 = vector.multi_reduction <add>, %76, %cst_26 [2] : vector<2x8x32xf32> to vector<2x8xf32>
    %78 = vector.shape_cast %77 : vector<2x8xf32> to vector<2x8x1xf32>
    %cst_27 = arith.constant 3.200000e+01 : f32
    %79 = vector.broadcast %cst_27 : f32 to vector<2x8x1xf32>
    %80 = arith.divf %78, %79 : vector<2x8x1xf32>
    %81 = vector.broadcast %80 : vector<2x8x1xf32> to vector<2x8x32xf32>
    %82 = arith.subf %76, %81 : vector<2x8x32xf32>
    %83 = arith.mulf %82, %82 : vector<2x8x32xf32>
    %cst_28 = arith.constant dense<0.000000e+00> : vector<2x8xf32>
    %84 = vector.multi_reduction <add>, %83, %cst_28 [2] : vector<2x8x32xf32> to vector<2x8xf32>
    %85 = vector.shape_cast %84 : vector<2x8xf32> to vector<2x8x1xf32>
    %cst_29 = arith.constant 3.200000e+01 : f32
    %86 = vector.broadcast %cst_29 : f32 to vector<2x8x1xf32>
    %87 = arith.divf %85, %86 : vector<2x8x1xf32>
    %cst_30 = arith.constant 9.99999996E-13 : f32
    %88 = vector.broadcast %cst_30 : f32 to vector<2x8x1xf32>
    %89 = arith.addf %87, %88 : vector<2x8x1xf32>
    %90 = math.rsqrt %89 : vector<2x8x1xf32>
    %91 = vector.broadcast %90 : vector<2x8x1xf32> to vector<2x8x32xf32>
    %92 = arith.mulf %82, %91 : vector<2x8x32xf32>
    %93 = arith.truncf %92 : vector<2x8x32xf32> to vector<2x8x32xbf16>
    %94 = vector.shape_cast %93 : vector<2x8x32xbf16> to vector<16x32xbf16>
    %c0_31 = arith.constant 0 : index
    %c0_32 = arith.constant 0 : index
    %c0_33 = arith.constant 0 : index
    %95 = vector.load %arg7[%c0_31, %c0_32, %c0_33] : memref<1x32x128xbf16, #tpu.memory_space<vmem>>, vector<1x32x128xbf16>
    %96 = vector.shape_cast %95 : vector<1x32x128xbf16> to vector<32x128xbf16>
    %cst_34 = arith.constant dense<0.000000e+00> : vector<16x128xf32>
    %97 = tpu.matmul %94, %96, %cst_34 {dimension_numbers = #tpu.dot_dimension_numbers<[1], [0], [0], [1], [0, 0, 1, 1], [], []>} : vector<16x32xbf16>, vector<32x128xbf16>, vector<16x128xf32> -> vector<16x128xf32>
    %c0_35 = arith.constant 0 : index
    %c0_36 = arith.constant 0 : index
    %c0_37 = arith.constant 0 : index
    %98 = vector.load %arg8[%c0_35, %c0_36, %c0_37] : memref<1x1x128xf32, #tpu.memory_space<vmem>>, vector<1x1x128xf32>
    %99 = vector.shape_cast %98 : vector<1x1x128xf32> to vector<1x128xf32>
    %100 = vector.broadcast %99 : vector<1x128xf32> to vector<16x128xf32>
    %101 = arith.addf %97, %100 : vector<16x128xf32>
    %102 = arith.truncf %101 : vector<16x128xf32> to vector<16x128xbf16>
    %cst_38 = arith.constant 1.703130e+00 : bf16
    %103 = vector.broadcast %cst_38 : bf16 to vector<16x128xbf16>
    %104 = arith.mulf %103, %102 : vector<16x128xbf16>
    %105 = arith.negf %104 : vector<16x128xbf16>
    %106 = math.exp %105 : vector<16x128xbf16>
    %cst_39 = arith.constant 1.000000e+00 : bf16
    %107 = vector.broadcast %cst_39 : bf16 to vector<16x128xbf16>
    %108 = arith.addf %107, %106 : vector<16x128xbf16>
    %109 = arith.divf %107, %108 : vector<16x128xbf16>
    %110 = arith.mulf %102, %109 : vector<16x128xbf16>
    %c0_40 = arith.constant 0 : index
    %c0_41 = arith.constant 0 : index
    %c0_42 = arith.constant 0 : index
    %111 = vector.load %arg9[%c0_40, %c0_41, %c0_42] : memref<1x128x32xbf16, #tpu.memory_space<vmem>>, vector<1x128x32xbf16>
    %112 = vector.shape_cast %111 : vector<1x128x32xbf16> to vector<128x32xbf16>
    %cst_43 = arith.constant dense<0.000000e+00> : vector<16x32xf32>
    %113 = tpu.matmul %110, %112, %cst_43 {dimension_numbers = #tpu.dot_dimension_numbers<[1], [0], [0], [1], [0, 0, 1, 1], [], []>} : vector<16x128xbf16>, vector<128x32xbf16>, vector<16x32xf32> -> vector<16x32xf32>
    %c0_44 = arith.constant 0 : index
    %c0_45 = arith.constant 0 : index
    %c0_46 = arith.constant 0 : index
    %114 = vector.load %arg10[%c0_44, %c0_45, %c0_46] : memref<1x1x32xf32, #tpu.memory_space<vmem>>, vector<1x1x32xf32>
    %115 = vector.shape_cast %114 : vector<1x1x32xf32> to vector<1x32xf32>
    %116 = vector.broadcast %115 : vector<1x32xf32> to vector<16x32xf32>
    %117 = arith.addf %113, %116 : vector<16x32xf32>
    %118 = vector.shape_cast %117 : vector<16x32xf32> to vector<2x8x32xf32>
    %119 = arith.addf %76, %118 : vector<2x8x32xf32>
    %c0_47 = arith.constant 0 : index
    %c0_48 = arith.constant 0 : index
    %c0_49 = arith.constant 0 : index
    %120 = vector.load %arg12[%c0_47, %c0_48, %c0_49] : memref<2x8x32xf32, #tpu.memory_space<vmem>>, vector<2x8x32xf32>
    tpu.vector_store %arg12[%c0_47, %c0_48, %c0_49], %119 {strides = array<i32>} : memref<2x8x32xf32, #tpu.memory_space<vmem>>, vector<2x8x32xf32>,
    %c1_i32 = arith.constant 1 : i32
    %121 = arith.cmpi eq, %arg1, %c1_i32 : i32
    %122 = arith.extui %121 : i1 to i32
    %c0_i32_50 = arith.constant 0 : i32
    %123 = arith.cmpi ne, %122, %c0_i32_50 : i32
    scf.if %123 {
      %c0_51 = arith.constant 0 : index
      %c0_52 = arith.constant 0 : index
      %c0_53 = arith.constant 0 : index
      %124 = vector.load %arg11[%c0_51, %c0_52, %c0_53] : memref<2x8x32xf32, #tpu.memory_space<vmem>>, vector<2x8x32xf32>
      tpu.vector_store %arg11[%c0_51, %c0_52, %c0_53], %119 {strides = array<i32>} : memref<2x8x32xf32, #tpu.memory_space<vmem>>, vector<2x8x32xf32>,
    } else {
    }
    return
  }
  func.func @transform_0(%arg0: i32, %arg1: i32) -> (i32, i32, i32) {
    %c0_i32 = arith.constant 0 : i32
    %c0_i32_0 = arith.constant 0 : i32
    %c0_i32_1 = arith.constant 0 : i32
    return %arg0, %c0_i32, %c0_i32_0 : i32, i32, i32
  }
  func.func @transform_1(%arg0: i32, %arg1: i32) -> (i32, i32, i32) {
    %c0_i32 = arith.constant 0 : i32
    %c0_i32_0 = arith.constant 0 : i32
    %c0_i32_1 = arith.constant 0 : i32
    return %arg1, %c0_i32, %c0_i32_0 : i32, i32, i32
  }
  func.func @transform_2(%arg0: i32, %arg1: i32) -> (i32, i32, i32) {
    %c0_i32 = arith.constant 0 : i32
    %c0_i32_0 = arith.constant 0 : i32
    %c0_i32_1 = arith.constant 0 : i32
    return %arg1, %c0_i32, %c0_i32_0 : i32, i32, i32
  }
  func.func @transform_3(%arg0: i32, %arg1: i32) -> (i32, i32, i32) {
    %c0_i32 = arith.constant 0 : i32
    %c0_i32_0 = arith.constant 0 : i32
    %c0_i32_1 = arith.constant 0 : i32
    return %arg1, %c0_i32, %c0_i32_0 : i32, i32, i32
  }
  func.func @transform_4(%arg0: i32, %arg1: i32) -> (i32, i32, i32) {
    %c0_i32 = arith.constant 0 : i32
    %c0_i32_0 = arith.constant 0 : i32
    %c0_i32_1 = arith.constant 0 : i32
    return %arg1, %c0_i32, %c0_i32_0 : i32, i32, i32
  }
  func.func @transform_5(%arg0: i32, %arg1: i32) -> (i32, i32, i32) {
    %c0_i32 = arith.constant 0 : i32
    %c0_i32_0 = arith.constant 0 : i32
    %c0_i32_1 = arith.constant 0 : i32
    return %arg1, %c0_i32, %c0_i32_0 : i32, i32, i32
  }
  func.func @transform_6(%arg0: i32, %arg1: i32) -> (i32, i32, i32) {
    %c0_i32 = arith.constant 0 : i32
    %c0_i32_0 = arith.constant 0 : i32
    %c0_i32_1 = arith.constant 0 : i32
    return %arg1, %c0_i32, %c0_i32_0 : i32, i32, i32
  }
  func.func @transform_7(%arg0: i32, %arg1: i32) -> (i32, i32, i32) {
    %c0_i32 = arith.constant 0 : i32
    %c0_i32_0 = arith.constant 0 : i32
    %c0_i32_1 = arith.constant 0 : i32
    return %arg1, %c0_i32, %c0_i32_0 : i32, i32, i32
  }
  func.func @transform_8(%arg0: i32, %arg1: i32) -> (i32, i32, i32) {
    %c0_i32 = arith.constant 0 : i32
    %c0_i32_0 = arith.constant 0 : i32
    %c0_i32_1 = arith.constant 0 : i32
    return %arg1, %c0_i32, %c0_i32_0 : i32, i32, i32
  }
  func.func @transform_9(%arg0: i32, %arg1: i32) -> (i32, i32, i32) {
    %c0_i32 = arith.constant 0 : i32
    %c0_i32_0 = arith.constant 0 : i32
    %c0_i32_1 = arith.constant 0 : i32
    return %arg0, %c0_i32, %c0_i32_0 : i32, i32, i32
  }
}

</mosaic_0001>

<llo_original>
// kernel: tpu_custom_call.1
$region0: #{tpu_custom_call.1}
  #allocation0 [shape = 'u32[]', space=smem, size = 0x4, offset = 0x4, fixed_abs, tag = 'smem constant byte address 0x4 - core index']
  #allocation1 [shape = 'u32[144,128]{1,0:T(1,128)}', space=vmem, size = 0x12000, scoped, tag = 'internal scratch']
  #allocation2 [shape = 'f32[2,8,32]{2,1,0:T(8,128)}', space=vmem, size = 0x2000, scoped, tag = 'scratch operand']
  %s0 = inlined_call_operand.hbm [shape: f32[2,8,32], index: 0, kind: input, shape index: {}, may-alias: {0,9}]
  %s1 = inlined_call_operand.vmem [shape: bf16[2,32,96], index: 1, kind: input, shape index: {}]
  %s2 = inlined_call_operand.vmem [shape: f32[2,1,96], index: 2, kind: input, shape index: {}]
  %s3 = inlined_call_operand.vmem [shape: bf16[2,32,32], index: 3, kind: input, shape index: {}]
  %s4 = inlined_call_operand.vmem [shape: f32[2,1,32], index: 4, kind: input, shape index: {}]
  %s5 = inlined_call_operand.vmem [shape: bf16[2,32,128], index: 5, kind: input, shape index: {}]
  %s6 = inlined_call_operand.vmem [shape: f32[2,1,128], index: 6, kind: input, shape index: {}]
  %s7 = inlined_call_operand.vmem [shape: bf16[2,128,32], index: 7, kind: input, shape index: {}]
  %s8 = inlined_call_operand.vmem [shape: f32[2,1,32], index: 8, kind: input, shape index: {}]
  %s9 = inlined_call_operand.hbm [shape: f32[2,8,32], index: 9, kind: output, shape index: {}, may-alias: {0,9}]
  %s10 = sld [smem:[#allocation0]]
  $region81: #{tpu_custom_call.1} parent=0
    _
  %s12 = ssub.s32 1, %s10
  %s13 = scalar_select 0, %s12, %s10
  $region1: #{tpu_custom_call.1} parent=0
    #allocation3 [shape = 'u8[8192]{0}', space=vmem, size = 0x2000, scoped, tag = 'input window, operand 0, single buffered']
    #allocation4 [shape = 's32[2]{0}', space=sflag, size = 0x8, scoped, tag = 'scoped memory for tpu_custom_call.1']
    #allocation5 [shape = 's32[2]{0}', space=sflag, size = 0x8, scoped, tag = 'scoped memory for tpu_custom_call.1']
    #allocation6 [shape = 'u8[8192]{0}', space=vmem, size = 0x2000, scoped, tag = 'output window, operand 0, single buffered']
    %14 = vsyncpa [#allocation4], 0
    %15 = vsyncpa [#allocation5], 0
    loop: start=0, step=1, limit=4
    $region2: #{tpu_custom_call.1} parent=1 // loop_pre_header
      _
    $region3: #{tpu_custom_call.1} parent=1 // loop_header
      %s17 = sphi 0, %s21
      %p18 = scmp.ge.s32.totalorder %s17, 4
      %s24 = sphi 0, %s36
      %s25 = sphi 0, %s32
      %s26 = sphi 0, %s24
      %s27 = sphi 0, %s25
      %s28 = sphi 0, %s26
      %s29 = sphi 0, %s27
      %s39 = sphi 0, %s41
      %s42 = sphi 0, %s39
      %s43 = sphi 0, %s42
      %s59 = sphi 0, %s43
      %s65 = sphi 0, %s67
      %s68 = sphi 0, %s65
      %s69 = sphi 0, %s68
      %s85 = sphi 0, %s69
      %s91 = sphi 0, %s93
      %s94 = sphi 0, %s91
      %s95 = sphi 0, %s94
      %s111 = sphi 0, %s95
      %s117 = sphi 0, %s119
      %s120 = sphi 0, %s117
      %s121 = sphi 0, %s120
      %s137 = sphi 0, %s121
      %s143 = sphi 0, %s145
      %s146 = sphi 0, %s143
      %s147 = sphi 0, %s146
      %s163 = sphi 0, %s147
      %s169 = sphi 0, %s171
      %s172 = sphi 0, %s169
      %s173 = sphi 0, %s172
      %s189 = sphi 0, %s173
      %s195 = sphi 0, %s197
      %s198 = sphi 0, %s195
      %s199 = sphi 0, %s198
      %s215 = sphi 0, %s199
      %s221 = sphi 0, %s223
      %s224 = sphi 0, %s221
      %s225 = sphi 0, %s224
      %s241 = sphi 0, %s225
      %s247 = sphi 0, %s249
      %s250 = sphi 0, %s247
      %s251 = sphi 0, %s250
      %s267 = sphi 0, %s251
      %s273 = sphi 0, %s275
      %s276 = sphi 0, %s273
      %s277 = sphi 0, %s276
      %s293 = sphi 0, %s277
    $region4: #{tpu_custom_call.1} parent=1 // loop_header_branch
      %20 = sbr.rel (%p18) target = $region8
    $region5: #{tpu_custom_call.1} parent=1 // loop_body
      %s22 = ssub.s32 %s17, 1
      %s23 = ssub.s32 %s17, 2
      %s30 = sadd.s32 1, %s25
      %p31 = scmp.ge.s32.totalorder %s30, 2
      %s32 = scalar_select %p31, 0, %s30
      %s33 = sadd.s32 1, %s24
      %s34 = scalar_select %p31, %s33, %s24
      %p35 = scmp.ge.s32.totalorder %s34, 1
      %s36 = scalar_select %p35, 0, %s34
      %s37 = ssub.s32 %s24, %s36
      %p38 = scmp.eq.s32.totalorder %s37, 0
      %s40 = sadd.s32 %s39, 1
      %s41 = scalar_select %p38, %s39, %s40
      %p44 = pneg %p38
      %p45 = scmp.eq.s32.totalorder %s17, 1
      %p46 = por %p44, %p45
      %p47 = scmp.ne.s32.totalorder %s39, %s42
      %p48 = scmp.eq.s32.totalorder %s17, 0
      %p49 = por %p47, %p48
      %p50 = scmp.ne.s32.totalorder %s39, %s42
      %p51 = scmp.eq.s32.totalorder %s22, 1
      %p52 = por %p50, %p51
      %p53 = scmp.ne.s32.totalorder %s42, %s43
      %p54 = scmp.eq.s32.totalorder %s22, 0
      %p55 = por %p53, %p54
      %p56 = scmp.ne.s32.totalorder %s42, %s43
      %p57 = scmp.eq.s32.totalorder %s23, 1
      %p58 = por %p56, %p57
      %p60 = scmp.ne.s32.totalorder %s43, %s59
      %p61 = scmp.eq.s32.totalorder %s23, 0
      %p62 = por %p60, %p61
      %s63 = ssub.s32 %s25, %s32
      %p64 = scmp.eq.s32.totalorder %s63, 0
      %s66 = sadd.s32 %s65, 1
      %s67 = scalar_select %p64, %s65, %s66
      %p70 = pneg %p64
      %p71 = scmp.eq.s32.totalorder %s17, 1
      %p72 = por %p70, %p71
      %p73 = scmp.ne.s32.totalorder %s65, %s68
      %p74 = scmp.eq.s32.totalorder %s17, 0
      %p75 = por %p73, %p74
      %p76 = scmp.ne.s32.totalorder %s65, %s68
      %p77 = scmp.eq.s32.totalorder %s22, 1
      %p78 = por %p76, %p77
      %p79 = scmp.ne.s32.totalorder %s68, %s69
      %p80 = scmp.eq.s32.totalorder %s22, 0
      %p81 = por %p79, %p80
      %p82 = scmp.ne.s32.totalorder %s68, %s69
      %p83 = scmp.eq.s32.totalorder %s23, 1
      %p84 = por %p82, %p83
      %p86 = scmp.ne.s32.totalorder %s69, %s85
      %p87 = scmp.eq.s32.totalorder %s23, 0
      %p88 = por %p86, %p87
      %s89 = ssub.s32 %s25, %s32
      %p90 = scmp.eq.s32.totalorder %s89, 0
      %s92 = sadd.s32 %s91, 1
      %s93 = scalar_select %p90, %s91, %s92
      %p96 = pneg %p90
      %p97 = scmp.eq.s32.totalorder %s17, 1
      %p98 = por %p96, %p97
      %p99 = scmp.ne.s32.totalorder %s91, %s94
      %p100 = scmp.eq.s32.totalorder %s17, 0
      %p101 = por %p99, %p100
      %p102 = scmp.ne.s32.totalorder %s91, %s94
      %p103 = scmp.eq.s32.totalorder %s22, 1
      %p104 = por %p102, %p103
      %p105 = scmp.ne.s32.totalorder %s94, %s95
      %p106 = scmp.eq.s32.totalorder %s22, 0
      %p107 = por %p105, %p106
      %p108 = scmp.ne.s32.totalorder %s94, %s95
      %p109 = scmp.eq.s32.totalorder %s23, 1
      %p110 = por %p108, %p109
      %p112 = scmp.ne.s32.totalorder %s95, %s111
      %p113 = scmp.eq.s32.totalorder %s23, 0
      %p114 = por %p112, %p113
      %s115 = ssub.s32 %s25, %s32
      %p116 = scmp.eq.s32.totalorder %s115, 0
      %s118 = sadd.s32 %s117, 1
      %s119 = scalar_select %p116, %s117, %s118
      %p122 = pneg %p116
      %p123 = scmp.eq.s32.totalorder %s17, 1
      %p124 = por %p122, %p123
      %p125 = scmp.ne.s32.totalorder %s117, %s120
      %p126 = scmp.eq.s32.totalorder %s17, 0
      %p127 = por %p125, %p126
      %p128 = scmp.ne.s32.totalorder %s117, %s120
      %p129 = scmp.eq.s32.totalorder %s22, 1
      %p130 = por %p128, %p129
      %p131 = scmp.ne.s32.totalorder %s120, %s121
      %p132 = scmp.eq.s32.totalorder %s22, 0
      %p133 = por %p131, %p132
      %p134 = scmp.ne.s32.totalorder %s120, %s121
      %p135 = scmp.eq.s32.totalorder %s23, 1
      %p136 = por %p134, %p135
      %p138 = scmp.ne.s32.totalorder %s121, %s137
      %p139 = scmp.eq.s32.totalorder %s23, 0
      %p140 = por %p138, %p139
      %s141 = ssub.s32 %s25, %s32
      %p142 = scmp.eq.s32.totalorder %s141, 0
      %s144 = sadd.s32 %s143, 1
      %s145 = scalar_select %p142, %s143, %s144
      %p148 = pneg %p142
      %p149 = scmp.eq.s32.totalorder %s17, 1
      %p150 = por %p148, %p149
      %p151 = scmp.ne.s32.totalorder %s143, %s146
      %p152 = scmp.eq.s32.totalorder %s17, 0
      %p153 = por %p151, %p152
      %p154 = scmp.ne.s32.totalorder %s143, %s146
      %p155 = scmp.eq.s32.totalorder %s22, 1
      %p156 = por %p154, %p155
      %p157 = scmp.ne.s32.totalorder %s146, %s147
      %p158 = scmp.eq.s32.totalorder %s22, 0
      %p159 = por %p157, %p158
      %p160 = scmp.ne.s32.totalorder %s146, %s147
      %p161 = scmp.eq.s32.totalorder %s23, 1
      %p162 = por %p160, %p161
      %p164 = scmp.ne.s32.totalorder %s147, %s163
      %p165 = scmp.eq.s32.totalorder %s23, 0
      %p166 = por %p164, %p165
      %s167 = ssub.s32 %s25, %s32
      %p168 = scmp.eq.s32.totalorder %s167, 0
      %s170 = sadd.s32 %s169, 1
      %s171 = scalar_select %p168, %s169, %s170
      %p174 = pneg %p168
      %p175 = scmp.eq.s32.totalorder %s17, 1
      %p176 = por %p174, %p175
      %p177 = scmp.ne.s32.totalorder %s169, %s172
      %p178 = scmp.eq.s32.totalorder %s17, 0
      %p179 = por %p177, %p178
      %p180 = scmp.ne.s32.totalorder %s169, %s172
      %p181 = scmp.eq.s32.totalorder %s22, 1
      %p182 = por %p180, %p181
      %p183 = scmp.ne.s32.totalorder %s172, %s173
      %p184 = scmp.eq.s32.totalorder %s22, 0
      %p185 = por %p183, %p184
      %p186 = scmp.ne.s32.totalorder %s172, %s173
      %p187 = scmp.eq.s32.totalorder %s23, 1
      %p188 = por %p186, %p187
      %p190 = scmp.ne.s32.totalorder %s173, %s189
      %p191 = scmp.eq.s32.totalorder %s23, 0
      %p192 = por %p190, %p191
      %s193 = ssub.s32 %s25, %s32
      %p194 = scmp.eq.s32.totalorder %s193, 0
      %s196 = sadd.s32 %s195, 1
      %s197 = scalar_select %p194, %s195, %s196
      %p200 = pneg %p194
      %p201 = scmp.eq.s32.totalorder %s17, 1
      %p202 = por %p200, %p201
      %p203 = scmp.ne.s32.totalorder %s195, %s198
      %p204 = scmp.eq.s32.totalorder %s17, 0
      %p205 = por %p203, %p204
      %p206 = scmp.ne.s32.totalorder %s195, %s198
      %p207 = scmp.eq.s32.totalorder %s22, 1
      %p208 = por %p206, %p207
      %p209 = scmp.ne.s32.totalorder %s198, %s199
      %p210 = scmp.eq.s32.totalorder %s22, 0
      %p211 = por %p209, %p210
      %p212 = scmp.ne.s32.totalorder %s198, %s199
      %p213 = scmp.eq.s32.totalorder %s23, 1
      %p214 = por %p212, %p213
      %p216 = scmp.ne.s32.totalorder %s199, %s215
      %p217 = scmp.eq.s32.totalorder %s23, 0
      %p218 = por %p216, %p217
      %s219 = ssub.s32 %s25, %s32
      %p220 = scmp.eq.s32.totalorder %s219, 0
      %s222 = sadd.s32 %s221, 1
      %s223 = scalar_select %p220, %s221, %s222
      %p226 = pneg %p220
      %p227 = scmp.eq.s32.totalorder %s17, 1
      %p228 = por %p226, %p227
      %p229 = scmp.ne.s32.totalorder %s221, %s224
      %p230 = scmp.eq.s32.totalorder %s17, 0
      %p231 = por %p229, %p230
      %p232 = scmp.ne.s32.totalorder %s221, %s224
      %p233 = scmp.eq.s32.totalorder %s22, 1
      %p234 = por %p232, %p233
      %p235 = scmp.ne.s32.totalorder %s224, %s225
      %p236 = scmp.eq.s32.totalorder %s22, 0
      %p237 = por %p235, %p236
      %p238 = scmp.ne.s32.totalorder %s224, %s225
      %p239 = scmp.eq.s32.totalorder %s23, 1
      %p240 = por %p238, %p239
      %p242 = scmp.ne.s32.totalorder %s225, %s241
      %p243 = scmp.eq.s32.totalorder %s23, 0
      %p244 = por %p242, %p243
      %s245 = ssub.s32 %s25, %s32
      %p246 = scmp.eq.s32.totalorder %s245, 0
      %s248 = sadd.s32 %s247, 1
      %s249 = scalar_select %p246, %s247, %s248
      %p252 = pneg %p246
      %p253 = scmp.eq.s32.totalorder %s17, 1
      %p254 = por %p252, %p253
      %p255 = scmp.ne.s32.totalorder %s247, %s250
      %p256 = scmp.eq.s32.totalorder %s17, 0
      %p257 = por %p255, %p256
      %p258 = scmp.ne.s32.totalorder %s247, %s250
      %p259 = scmp.eq.s32.totalorder %s22, 1
      %p260 = por %p258, %p259
      %p261 = scmp.ne.s32.totalorder %s250, %s251
      %p262 = scmp.eq.s32.totalorder %s22, 0
      %p263 = por %p261, %p262
      %p264 = scmp.ne.s32.totalorder %s250, %s251
      %p265 = scmp.eq.s32.totalorder %s23, 1
      %p266 = por %p264, %p265
      %p268 = scmp.ne.s32.totalorder %s251, %s267
      %p269 = scmp.eq.s32.totalorder %s23, 0
      %p270 = por %p268, %p269
      %s271 = ssub.s32 %s24, %s36
      %p272 = scmp.eq.s32.totalorder %s271, 0
      %s274 = sadd.s32 %s273, 1
      %s275 = scalar_select %p272, %s273, %s274
      %p278 = pneg %p272
      %p279 = scmp.eq.s32.totalorder %s17, 1
      %p280 = por %p278, %p279
      %p281 = scmp.ne.s32.totalorder %s273, %s276
      %p282 = scmp.eq.s32.totalorder %s17, 0
      %p283 = por %p281, %p282
      %p284 = scmp.ne.s32.totalorder %s273, %s276
      %p285 = scmp.eq.s32.totalorder %s22, 1
      %p286 = por %p284, %p285
      %p287 = scmp.ne.s32.totalorder %s276, %s277
      %p288 = scmp.eq.s32.totalorder %s22, 0
      %p289 = por %p287, %p288
      %p290 = scmp.ne.s32.totalorder %s276, %s277
      %p291 = scmp.eq.s32.totalorder %s23, 1
      %p292 = por %p290, %p291
      %p294 = scmp.ne.s32.totalorder %s277, %s293
      %p295 = scmp.eq.s32.totalorder %s23, 0
      %p296 = por %p294, %p295
      %p297 = scmp.le.s32.totalorder 1, %s17
      %p298 = scmp.lt.s32.totalorder %s17, 3
      %p299 = pnand %p297, %p298
      %p300 = pneg %p299
      // Predicated region
      $region9: #{tpu_custom_call.1} parent=5 // pred_check
        _
      $region10: #{tpu_custom_call.1} parent=5 // pred_check_branch
        %302 = sbr.rel (%p299) target = $region12
      $region11: #{tpu_custom_call.1} parent=5 // pred_region
        %s303 = ssub.s32 %s17, 1
        // Predicated region
        $region13: #{tpu_custom_call.1} parent=11 // pred_check
          %p304 = pneg %p55
        $region14: #{tpu_custom_call.1} parent=11 // pred_check_branch
          %306 = sbr.rel (%p304) target = $region16
        $region15: #{tpu_custom_call.1} parent=11 // pred_region
          %s307 = smul.u32 2, %s26
          %s309 = ssub.s32 256, 256
          %310 = vsyncadd [#allocation4], %s309
          %s311 = smul.addr %s307, 128
          %s312 = scalar_lea.hbm %s0, %s311
          %s313 = sshll.u32 [#allocation3], 4
          %s314 = int_to_ptr.vmem [resolvable:$true] %s313
          %319 = dma.hbm_to_vmem [thread:$0]  %s312, 256, %s314, [#allocation4], 128, 128, 8
        $region16: #{tpu_custom_call.1} parent=11 // pred_fallthru
          _
      $region12: #{tpu_custom_call.1} parent=5 // pred_fallthru
        _
      %p320 = scmp.lt.s32.totalorder %s17, 2
      // Predicated region
      $region17: #{tpu_custom_call.1} parent=5 // pred_check
        %p321 = pneg %p320
      $region18: #{tpu_custom_call.1} parent=5 // pred_check_branch
        %323 = sbr.rel (%p321) target = $region20
      $region19: #{tpu_custom_call.1} parent=5 // pred_region
        // Predicated region
        $region21: #{tpu_custom_call.1} parent=19 // pred_check
          %p324 = pneg %p75
        $region22: #{tpu_custom_call.1} parent=19 // pred_check_branch
          %326 = sbr.rel (%p324) target = $region24
        $region23: #{tpu_custom_call.1} parent=19 // pred_region
          %p327 = scmp.lt.s32.totalorder %s25, 1
          %s328 = scalar_select %p327, %s25, 1
          %s329 = smul.addr %s328, 4
          %s330 = smul.addr %s329, 4
          %s331 = scalar_lea.vmem %s1, %s330
        $region24: #{tpu_custom_call.1} parent=19 // pred_fallthru
          _
        // Predicated region
        $region25: #{tpu_custom_call.1} parent=19 // pred_check
          %p332 = pneg %p101
        $region26: #{tpu_custom_call.1} parent=19 // pred_check_branch
          %334 = sbr.rel (%p332) target = $region28
        $region27: #{tpu_custom_call.1} parent=19 // pred_region
          %p335 = scmp.lt.s32.totalorder %s25, 1
          %s336 = scalar_select %p335, %s25, 1
          %s337 = scalar_lea.vmem %s2, %s336
        $region28: #{tpu_custom_call.1} parent=19 // pred_fallthru
          _
        // Predicated region
        $region29: #{tpu_custom_call.1} parent=19 // pred_check
          %p338 = pneg %p127
        $region30: #{tpu_custom_call.1} parent=19 // pred_check_branch
          %340 = sbr.rel (%p338) target = $region32
        $region31: #{tpu_custom_call.1} parent=19 // pred_region
          %p341 = scmp.lt.s32.totalorder %s25, 1
          %s342 = scalar_select %p341, %s25, 1
          %s343 = smul.addr %s342, 4
          %s344 = smul.addr %s343, 4
          %s345 = scalar_lea.vmem %s3, %s344
        $region32: #{tpu_custom_call.1} parent=19 // pred_fallthru
          _
        // Predicated region
        $region33: #{tpu_custom_call.1} parent=19 // pred_check
          %p346 = pneg %p153
        $region34: #{tpu_custom_call.1} parent=19 // pred_check_branch
          %348 = sbr.rel (%p346) target = $region36
        $region35: #{tpu_custom_call.1} parent=19 // pred_region
          %p349 = scmp.lt.s32.totalorder %s25, 1
          %s350 = scalar_select %p349, %s25, 1
          %s351 = scalar_lea.vmem %s4, %s350
        $region36: #{tpu_custom_call.1} parent=19 // pred_fallthru
          _
        // Predicated region
        $region37: #{tpu_custom_call.1} parent=19 // pred_check
          %p352 = pneg %p179
        $region38: #{tpu_custom_call.1} parent=19 // pred_check_branch
          %354 = sbr.rel (%p352) target = $region40
        $region39: #{tpu_custom_call.1} parent=19 // pred_region
          %p355 = scmp.lt.s32.totalorder %s25, 1
          %s356 = scalar_select %p355, %s25, 1
          %s357 = smul.addr %s356, 4
          %s358 = smul.addr %s357, 4
          %s359 = scalar_lea.vmem %s5, %s358
        $region40: #{tpu_custom_call.1} parent=19 // pred_fallthru
          _
        // Predicated region
        $region41: #{tpu_custom_call.1} parent=19 // pred_check
          %p360 = pneg %p205
        $region42: #{tpu_custom_call.1} parent=19 // pred_check_branch
          %362 = sbr.rel (%p360) target = $region44
        $region43: #{tpu_custom_call.1} parent=19 // pred_region
          %p363 = scmp.lt.s32.totalorder %s25, 1
          %s364 = scalar_select %p363, %s25, 1
          %s365 = scalar_lea.vmem %s6, %s364
        $region44: #{tpu_custom_call.1} parent=19 // pred_fallthru
          _
        // Predicated region
        $region45: #{tpu_custom_call.1} parent=19 // pred_check
          %p366 = pneg %p231
        $region46: #{tpu_custom_call.1} parent=19 // pred_check_branch
          %368 = sbr.rel (%p366) target = $region48
        $region47: #{tpu_custom_call.1} parent=19 // pred_region
          %p369 = scmp.lt.s32.totalorder %s25, 1
          %s370 = scalar_select %p369, %s25, 1
          %s371 = smul.addr %s370, 16
          %s372 = smul.addr %s371, 4
          %s373 = scalar_lea.vmem %s7, %s372
        $region48: #{tpu_custom_call.1} parent=19 // pred_fallthru
          _
        // Predicated region
        $region49: #{tpu_custom_call.1} parent=19 // pred_check
          %p374 = pneg %p257
        $region50: #{tpu_custom_call.1} parent=19 // pred_check_branch
          %376 = sbr.rel (%p374) target = $region52
        $region51: #{tpu_custom_call.1} parent=19 // pred_region
          %p377 = scmp.lt.s32.totalorder %s25, 1
          %s378 = scalar_select %p377, %s25, 1
          %s379 = scalar_lea.vmem %s8, %s378
        $region52: #{tpu_custom_call.1} parent=19 // pred_fallthru
          _
      $region20: #{tpu_custom_call.1} parent=5 // pred_fallthru
        _
      %p380 = scmp.le.s32.totalorder 1, %s17
      %p381 = scmp.lt.s32.totalorder %s17, 3
      %p382 = pnand %p380, %p381
      %p383 = pneg %p382
      // Predicated region
      $region53: #{tpu_custom_call.1} parent=5 // pred_check
        _
      $region54: #{tpu_custom_call.1} parent=5 // pred_check_branch
        %385 = sbr.rel (%p382) target = $region56
      $region55: #{tpu_custom_call.1} parent=5 // pred_region
        %s386 = ssub.s32 %s17, 1
        // Predicated region
        $region57: #{tpu_custom_call.1} parent=55 // pred_check
          %p387 = pneg %p55
        $region58: #{tpu_custom_call.1} parent=55 // pred_check_branch
          %389 = sbr.rel (%p387) target = $region60
        $region59: #{tpu_custom_call.1} parent=55 // pred_region
          %390 = dma.done [#allocation4], 256
        $region60: #{tpu_custom_call.1} parent=55 // pred_fallthru
          _
        %p391 = pneg %p55
        %p392 = pneg %p52
        %p393 = scmp.lt.s32.totalorder %s27, 1
        %s394 = scalar_select %p393, %s27, 1
        %s395 = smul.addr %s394, 4
        %s396 = smul.addr %s395, 4
        %s397 = scalar_lea.vmem %s1, %s396
        %p398 = pneg %p81
        %p399 = pneg %p78
        %p400 = scmp.lt.s32.totalorder %s27, 1
        %s401 = scalar_select %p400, %s27, 1
        %s402 = scalar_lea.vmem %s2, %s401
        %p403 = pneg %p107
        %p404 = pneg %p104
        %p405 = scmp.lt.s32.totalorder %s27, 1
        %s406 = scalar_select %p405, %s27, 1
        %s407 = smul.addr %s406, 4
        %s408 = smul.addr %s407, 4
        %s409 = scalar_lea.vmem %s3, %s408
        %p410 = pneg %p133
        %p411 = pneg %p130
        %p412 = scmp.lt.s32.totalorder %s27, 1
        %s413 = scalar_select %p412, %s27, 1
        %s414 = scalar_lea.vmem %s4, %s413
        %p415 = pneg %p159
        %p416 = pneg %p156
        %p417 = scmp.lt.s32.totalorder %s27, 1
        %s418 = scalar_select %p417, %s27, 1
        %s419 = smul.addr %s418, 4
        %s420 = smul.addr %s419, 4
        %s421 = scalar_lea.vmem %s5, %s420
        %p422 = pneg %p185
        %p423 = pneg %p182
        %p424 = scmp.lt.s32.totalorder %s27, 1
        %s425 = scalar_select %p424, %s27, 1
        %s426 = scalar_lea.vmem %s6, %s425
        %p427 = pneg %p211
        %p428 = pneg %p208
        %p429 = scmp.lt.s32.totalorder %s27, 1
        %s430 = scalar_select %p429, %s27, 1
        %s431 = smul.addr %s430, 16
        %s432 = smul.addr %s431, 4
        %s433 = scalar_lea.vmem %s7, %s432
        %p434 = pneg %p237
        %p435 = pneg %p234
        %p436 = scmp.lt.s32.totalorder %s27, 1
        %s437 = scalar_select %p436, %s27, 1
        %s438 = scalar_lea.vmem %s8, %s437
        %p439 = pneg %p263
        %p440 = pneg %p260
        %p441 = pneg %p289
        %p442 = pneg %p286
        %s443 = smul.u32 2, %s26
        %p444 = scmp.lt.s32.totalorder %s27, 1
        %s445 = scalar_select %p444, %s27, 1
        %s446 = smul.addr %s445, 4
        %s447 = smul.addr %s446, 4
        %s448 = scalar_lea.vmem %s1, %s447
        %p449 = scmp.lt.s32.totalorder %s27, 1
        %s450 = scalar_select %p449, %s27, 1
        %s451 = scalar_lea.vmem %s2, %s450
        %p452 = scmp.lt.s32.totalorder %s27, 1
        %s453 = scalar_select %p452, %s27, 1
        %s454 = smul.addr %s453, 4
        %s455 = smul.addr %s454, 4
        %s456 = scalar_lea.vmem %s3, %s455
        %p457 = scmp.lt.s32.totalorder %s27, 1
        %s458 = scalar_select %p457, %s27, 1
        %s459 = scalar_lea.vmem %s4, %s458
        %p460 = scmp.lt.s32.totalorder %s27, 1
        %s461 = scalar_select %p460, %s27, 1
        %s462 = smul.addr %s461, 4
        %s463 = smul.addr %s462, 4
        %s464 = scalar_lea.vmem %s5, %s463
        %p465 = scmp.lt.s32.totalorder %s27, 1
        %s466 = scalar_select %p465, %s27, 1
        %s467 = scalar_lea.vmem %s6, %s466
        %p468 = scmp.lt.s32.totalorder %s27, 1
        %s469 = scalar_select %p468, %s27, 1
        %s470 = smul.addr %s469, 16
        %s471 = smul.addr %s470, 4
        %s472 = scalar_lea.vmem %s7, %s471
        %p473 = scmp.lt.s32.totalorder %s27, 1
        %s474 = scalar_select %p473, %s27, 1
        %s475 = scalar_lea.vmem %s8, %s474
        %s476 = smul.u32 2, %s26
        %p480 = scmp.eq.s32.totalorder %s27, 0
        // Predicated region
        $region61: #{tpu_custom_call.1} parent=55 // pred_check
          %p481 = pneg %p480
        $region62: #{tpu_custom_call.1} parent=55 // pred_check_branch
          %483 = sbr.rel (%p481) target = $region64
        $region63: #{tpu_custom_call.1} parent=55 // pred_region
          %v484 = vld [vmem:[#allocation3] sm:$0xff]
          %v485 = vld [vmem:[#allocation3 + $0x8] sm:$0xff]
          %vm486 = vcmask 261120
          %487 = vst.msk [vmem:[#allocation2] sm:$0xff] %vm486, %v484
          %488 = vst.msk [vmem:[#allocation2 + $0x8] sm:$0xff] %vm486, %v485
        $region64: #{tpu_custom_call.1} parent=55 // pred_fallthru
          _
        %v489 = vld [vmem:[#allocation2] sm:$0xff]
        %v490 = vld [vmem:[#allocation2 + $0x8] sm:$0xff]
        %vm491 = vcmask 261120
        %v492 = vsel %vm491, %v489, 0.0
        %493 = vadd.xlane.f32.xlu0 %v492
        %v494 = vpop.xlane.xlu0 %493
        %v495 = vsel %vm491, %v490, 0.0
        %496 = vadd.xlane.f32.xlu0 %v495
        %v497 = vpop.xlane.xlu0 %496
        %v498 = vrcp.pop 32.0
        %v499 = vmul.f32 %v494, %v498
        %v500 = vmul.f32 %v497, %v498
        %v501 = vsub.f32 %v489, %v499
        %v502 = vsub.f32 %v490, %v500
        %v503 = vmul.f32 %v501, %v501
        %v504 = vmul.f32 %v502, %v502
        %v505 = vsel %vm491, %v503, 0.0
        %506 = vadd.xlane.f32.xlu0 %v505
        %v507 = vpop.xlane.xlu0 %506
        %v508 = vsel %vm491, %v504, 0.0
        %509 = vadd.xlane.f32.xlu0 %v508
        %v510 = vpop.xlane.xlu0 %509
        %v511 = vmul.f32 %v507, %v498
        %v512 = vmul.f32 %v510, %v498
        %v513 = vadd.f32 %v511, 1e-12
        %v514 = vadd.f32 %v512, 1e-12
        %v515 = vrsqrt.pop %v513
        %v516 = vrsqrt.pop %v514
        %v517 = vmul.f32 %v501, %v515
        %v518 = vmul.f32 %v502, %v516
        %v519 = vpack.c.bf16 %v517, %v517
        %v520 = vpack.c.bf16 %v518, %v518
        %v521 = vld [vmem:[%s448] sm:$0xf]
        %v522 = vld [vmem:[%s448 + $0x4] sm:$0xf]
        %v523 = vld [vmem:[%s448 + $0x8] sm:$0xf]
        %v524 = vld [vmem:[%s448 + $0xc] sm:$0xf]
        %v525 = vld [vmem:[%s451] sm:$0x1]
        %v527 = vlaneseq
        %v528 = vshrl.u32 %v527, 7
        %v529 = vsub.s32 0, %v528
        %v530 = vrot.slane %v525, %v529
        %v534 = vunpack.c.l.b16 %v519
        %v535 = vunpack.c.l.b16 %v520
        %v536 = vpack.c.b16 %v535, %v534
        %v541 = vunpack.c.l.b16 %v521
        %v542 = vunpack.c.l.b16 %v522
        %v543 = vunpack.c.l.b16 %v523
        %v544 = vunpack.c.l.b16 %v524
        %v545 = vpack.c.b16 %v542, %v541
        %v546 = vpack.c.b16 %v544, %v543
        %v550 = vsel %vm491, %v536, 0
        %552 = vmatprep.subr.bf16.mxu0 0
        %553 = vmatpush1.bf16.msra.mxu0 %v545
        %554 = vmatprep.subr.bf16.mxu0 0
        %555 = vmatpush1.bf16.msra.mxu0 %v546
        %556 = vmatprep.subr.bf16.mxu0 0
        %557 = vmatpush1.bf16.msra.mxu0 0
        %558 = vmatprep.subr.bf16.mxu0 0
        %559 = vmatpush1.bf16.msra.mxu0 0
        %560 = vmatprep.subr.bf16.mxu0 0
        %561 = vmatpush1.bf16.msra.mxu0 0
        %562 = vmatprep.subr.bf16.mxu0 0
        %563 = vmatpush1.bf16.msra.mxu0 0
        %564 = vmatprep.subr.bf16.mxu0 0
        %565 = vmatpush1.bf16.msra.mxu0 0
        %566 = vmatprep.subr.bf16.mxu0 0
        %567 = vmatpush1.bf16.msra.mxu0 0
        %568 = vmatprep.subr.bf16.mxu0 0
        %569 = vmatpush1.bf16.msra.mxu0 0
        %570 = vmatprep.subr.bf16.mxu0 0
        %571 = vmatpush1.bf16.msra.mxu0 0
        %572 = vmatprep.subr.bf16.mxu0 0
        %573 = vmatpush1.bf16.msra.mxu0 0
        %574 = vmatprep.subr.bf16.mxu0 0
        %575 = vmatpush1.bf16.msra.mxu0 0
        %576 = vmatprep.subr.bf16.mxu0 0
        %577 = vmatpush1.bf16.msra.mxu0 0
        %578 = vmatprep.subr.bf16.mxu0 0
        %579 = vmatpush1.bf16.msra.mxu0 0
        %580 = vmatprep.subr.bf16.mxu0 0
        %581 = vmatpush1.bf16.msra.mxu0 0
        %582 = vmatprep.subr.bf16.mxu0 0
        %583 = vmatpush1.bf16.msra.mxu0 0
        %584 = vmatprep.mubr.bf16.mxu0 0
        %585 = vmatmul.mubr.bf16.gmra.mrb[0].mxu0 %v550
        %v586 = vpop.f32.mrb[0].mxu0
        %v587 = vadd.f32 %v530, %v586
        %v588 = vpop.f32.mrb[0].mxu0
        %v589 = vpop.f32.mrb[0].mxu0
        %v590 = vadd.f32 %v530, %v589
        %v591 = vpop.f32.mrb[0].mxu0
        %592 = vdwg.mxu0
        %v593 = vpack.c.bf16 %v590, %v587
        %v595 = vunpack.c.l.b16 %v593
        %v596 = vunpack.c.h.b16 %v593
        %v597 = vpack.c.b16 %v595, %v595
        %v598 = vpack.c.b16 %v596, %v596
        %599 = vrot.lane.b32.xlu0 %v597, 120
        %v600 = vpop.permute.xlu0 %599
        %601 = vrot.lane.b32.xlu0 %v598, 120
        %v602 = vpop.permute.xlu0 %601
        %603 = vrot.lane.b32.xlu0 %v597, 112
        %v604 = vpop.permute.xlu0 %603
        %605 = vrot.lane.b32.xlu0 %v598, 112
        %v606 = vpop.permute.xlu0 %605
        %607 = vrot.lane.b32.xlu0 %v597, 104
        %v608 = vpop.permute.xlu0 %607
        %609 = vrot.lane.b32.xlu0 %v598, 104
        %v610 = vpop.permute.xlu0 %609
        %611 = vrot.lane.b32.xlu0 %v597, 96
        %v612 = vpop.permute.xlu0 %611
        %vm613 = vcmask 64512
        %v615 = vsel %vm613, %v597, 0
        %v618 = vsel %vm613, %v612, 0
        %620 = vmatprep.subr.bf16.mxu0 0
        %621 = vmatpush1.bf16.xpose.msra.mxu0 %v618
        %622 = vmatprep.subr.bf16.mxu0 0
        %623 = vmatpush1.bf16.xpose.msra.mxu0 0
        %624 = vmatprep.subr.bf16.mxu0 0
        %625 = vmatpush1.bf16.xpose.msra.mxu0 0
        %626 = vmatprep.subr.bf16.mxu0 0
        %627 = vmatpush1.bf16.xpose.msra.mxu0 0
        %628 = vmatprep.subr.bf16.mxu0 0
        %629 = vmatpush1.bf16.xpose.msra.mxu0 0
        %630 = vmatprep.subr.bf16.mxu0 0
        %631 = vmatpush1.bf16.xpose.msra.mxu0 0
        %632 = vmatprep.subr.bf16.mxu0 0
        %633 = vmatpush1.bf16.xpose.msra.mxu0 0
        %634 = vmatprep.subr.bf16.mxu0 0
        %635 = vmatpush1.bf16.xpose.msra.mxu0 0
        %636 = vmatprep.subr.bf16.mxu0 0
        %637 = vmatpush1.bf16.xpose.msra.mxu0 0
        %638 = vmatprep.subr.bf16.mxu0 0
        %639 = vmatpush1.bf16.xpose.msra.mxu0 0
        %640 = vmatprep.subr.bf16.mxu0 0
        %641 = vmatpush1.bf16.xpose.msra.mxu0 0
        %642 = vmatprep.subr.bf16.mxu0 0
        %643 = vmatpush1.bf16.xpose.msra.mxu0 0
        %644 = vmatprep.subr.bf16.mxu0 0
        %645 = vmatpush1.bf16.xpose.msra.mxu0 0
        %646 = vmatprep.subr.bf16.mxu0 0
        %647 = vmatpush1.bf16.xpose.msra.mxu0 0
        %648 = vmatprep.subr.bf16.mxu0 0
        %649 = vmatpush1.bf16.xpose.msra.mxu0 0
        %650 = vmatprep.subr.bf16.mxu0 0
        %651 = vmatpush1.bf16.xpose.msra.mxu0 0
        %652 = vmatprep.mubr.bf16.mxu0 0
        %653 = vmatmul.mubr.bf16.gmra.mrb[0].mxu0 %v615
        %v654 = vpop.f32.mrb[0].mxu0
        %v655 = vadd.f32 0.0, %v654
        %v656 = vpop.f32.mrb[0].mxu0
        %v657 = vpop.f32.mrb[0].mxu0
        %v658 = vpop.f32.mrb[0].mxu0
        %659 = vdwg.mxu0
        %660 = vrot.lane.b32.xlu0 %v598, 96
        %v661 = vpop.permute.xlu0 %660
        %v663 = vsel %vm613, %v598, 0
        %v666 = vsel %vm613, %v661, 0
        %668 = vmatprep.subr.bf16.mxu0 0
        %669 = vmatpush1.bf16.xpose.msra.mxu0 %v666
        %670 = vmatprep.subr.bf16.mxu0 0
        %671 = vmatpush1.bf16.xpose.msra.mxu0 0
        %672 = vmatprep.subr.bf16.mxu0 0
        %673 = vmatpush1.bf16.xpose.msra.mxu0 0
        %674 = vmatprep.subr.bf16.mxu0 0
        %675 = vmatpush1.bf16.xpose.msra.mxu0 0
        %676 = vmatprep.subr.bf16.mxu0 0
        %677 = vmatpush1.bf16.xpose.msra.mxu0 0
        %678 = vmatprep.subr.bf16.mxu0 0
        %679 = vmatpush1.bf16.xpose.msra.mxu0 0
        %680 = vmatprep.subr.bf16.mxu0 0
        %681 = vmatpush1.bf16.xpose.msra.mxu0 0
        %682 = vmatprep.subr.bf16.mxu0 0
        %683 = vmatpush1.bf16.xpose.msra.mxu0 0
        %684 = vmatprep.subr.bf16.mxu0 0
        %685 = vmatpush1.bf16.xpose.msra.mxu0 0
        %686 = vmatprep.subr.bf16.mxu0 0
        %687 = vmatpush1.bf16.xpose.msra.mxu0 0
        %688 = vmatprep.subr.bf16.mxu0 0
        %689 = vmatpush1.bf16.xpose.msra.mxu0 0
        %690 = vmatprep.subr.bf16.mxu0 0
        %691 = vmatpush1.bf16.xpose.msra.mxu0 0
        %692 = vmatprep.subr.bf16.mxu0 0
        %693 = vmatpush1.bf16.xpose.msra.mxu0 0
        %694 = vmatprep.subr.bf16.mxu0 0
        %695 = vmatpush1.bf16.xpose.msra.mxu0 0
        %696 = vmatprep.subr.bf16.mxu0 0
        %697 = vmatpush1.bf16.xpose.msra.mxu0 0
        %698 = vmatprep.subr.bf16.mxu0 0
        %699 = vmatpush1.bf16.xpose.msra.mxu0 0
        %700 = vmatprep.mubr.bf16.mxu0 0
        %701 = vmatmul.mubr.bf16.gmra.mrb[0].mxu0 %v663
        %v702 = vpop.f32.mrb[0].mxu0
        %v703 = vadd.f32 0.0, %v702
        %v704 = vpop.f32.mrb[0].mxu0
        %v705 = vpop.f32.mrb[0].mxu0
        %v706 = vpop.f32.mrb[0].mxu0
        %707 = vdwg.mxu0
        %v708 = vunpack.c.l.b16 %v600
        %v709 = vpack.c.b16 %v708, %v708
        %710 = vrot.lane.b32.xlu0 %v709, 96
        %v711 = vpop.permute.xlu0 %710
        %v713 = vsel %vm613, %v600, 0
        %v716 = vsel %vm613, %v711, 0
        %718 = vmatprep.subr.bf16.mxu0 0
        %719 = vmatpush1.bf16.xpose.msra.mxu0 %v716
        %720 = vmatprep.subr.bf16.mxu0 0
        %721 = vmatpush1.bf16.xpose.msra.mxu0 0
        %722 = vmatprep.subr.bf16.mxu0 0
        %723 = vmatpush1.bf16.xpose.msra.mxu0 0
        %724 = vmatprep.subr.bf16.mxu0 0
        %725 = vmatpush1.bf16.xpose.msra.mxu0 0
        %726 = vmatprep.subr.bf16.mxu0 0
        %727 = vmatpush1.bf16.xpose.msra.mxu0 0
        %728 = vmatprep.subr.bf16.mxu0 0
        %729 = vmatpush1.bf16.xpose.msra.mxu0 0
        %730 = vmatprep.subr.bf16.mxu0 0
        %731 = vmatpush1.bf16.xpose.msra.mxu0 0
        %732 = vmatprep.subr.bf16.mxu0 0
        %733 = vmatpush1.bf16.xpose.msra.mxu0 0
        %734 = vmatprep.subr.bf16.mxu0 0
        %735 = vmatpush1.bf16.xpose.msra.mxu0 0
        %736 = vmatprep.subr.bf16.mxu0 0
        %737 = vmatpush1.bf16.xpose.msra.mxu0 0
        %738 = vmatprep.subr.bf16.mxu0 0
        %739 = vmatpush1.bf16.xpose.msra.mxu0 0
        %740 = vmatprep.subr.bf16.mxu0 0
        %741 = vmatpush1.bf16.xpose.msra.mxu0 0
        %742 = vmatprep.subr.bf16.mxu0 0
        %743 = vmatpush1.bf16.xpose.msra.mxu0 0
        %744 = vmatprep.subr.bf16.mxu0 0
        %745 = vmatpush1.bf16.xpose.msra.mxu0 0
        %746 = vmatprep.subr.bf16.mxu0 0
        %747 = vmatpush1.bf16.xpose.msra.mxu0 0
        %748 = vmatprep.subr.bf16.mxu0 0
        %749 = vmatpush1.bf16.xpose.msra.mxu0 0
        %750 = vmatprep.mubr.bf16.mxu0 0
        %751 = vmatmul.mubr.bf16.gmra.mrb[0].mxu0 %v713
        %v752 = vpop.f32.mrb[0].mxu0
        %v753 = vadd.f32 0.0, %v752
        %v754 = vpop.f32.mrb[0].mxu0
        %v755 = vpop.f32.mrb[0].mxu0
        %v756 = vpop.f32.mrb[0].mxu0
        %757 = vdwg.mxu0
        %v758 = vunpack.c.l.b16 %v602
        %v759 = vpack.c.b16 %v758, %v758
        %760 = vrot.lane.b32.xlu0 %v759, 96
        %v761 = vpop.permute.xlu0 %760
        %v763 = vsel %vm613, %v602, 0
        %v766 = vsel %vm613, %v761, 0
        %768 = vmatprep.subr.bf16.mxu0 0
        %769 = vmatpush1.bf16.xpose.msra.mxu0 %v766
        %770 = vmatprep.subr.bf16.mxu0 0
        %771 = vmatpush1.bf16.xpose.msra.mxu0 0
        %772 = vmatprep.subr.bf16.mxu0 0
        %773 = vmatpush1.bf16.xpose.msra.mxu0 0
        %774 = vmatprep.subr.bf16.mxu0 0
        %775 = vmatpush1.bf16.xpose.msra.mxu0 0
        %776 = vmatprep.subr.bf16.mxu0 0
        %777 = vmatpush1.bf16.xpose.msra.mxu0 0
        %778 = vmatprep.subr.bf16.mxu0 0
        %779 = vmatpush1.bf16.xpose.msra.mxu0 0
        %780 = vmatprep.subr.bf16.mxu0 0
        %781 = vmatpush1.bf16.xpose.msra.mxu0 0
        %782 = vmatprep.subr.bf16.mxu0 0
        %783 = vmatpush1.bf16.xpose.msra.mxu0 0
        %784 = vmatprep.subr.bf16.mxu0 0
        %785 = vmatpush1.bf16.xpose.msra.mxu0 0
        %786 = vmatprep.subr.bf16.mxu0 0
        %787 = vmatpush1.bf16.xpose.msra.mxu0 0
        %788 = vmatprep.subr.bf16.mxu0 0
        %789 = vmatpush1.bf16.xpose.msra.mxu0 0
        %790 = vmatprep.subr.bf16.mxu0 0
        %791 = vmatpush1.bf16.xpose.msra.mxu0 0
        %792 = vmatprep.subr.bf16.mxu0 0
        %793 = vmatpush1.bf16.xpose.msra.mxu0 0
        %794 = vmatprep.subr.bf16.mxu0 0
        %795 = vmatpush1.bf16.xpose.msra.mxu0 0
        %796 = vmatprep.subr.bf16.mxu0 0
        %797 = vmatpush1.bf16.xpose.msra.mxu0 0
        %798 = vmatprep.subr.bf16.mxu0 0
        %799 = vmatpush1.bf16.xpose.msra.mxu0 0
        %800 = vmatprep.mubr.bf16.mxu0 0
        %801 = vmatmul.mubr.bf16.gmra.mrb[0].mxu0 %v763
        %v802 = vpop.f32.mrb[0].mxu0
        %v803 = vadd.f32 0.0, %v802
        %v804 = vpop.f32.mrb[0].mxu0
        %v805 = vpop.f32.mrb[0].mxu0
        %v806 = vpop.f32.mrb[0].mxu0
        %807 = vdwg.mxu0
        %v808 = vunpack.c.l.b16 %v604
        %v809 = vpack.c.b16 %v808, %v808
        %810 = vrot.lane.b32.xlu0 %v809, 96
        %v811 = vpop.permute.xlu0 %810
        %v813 = vsel %vm613, %v604, 0
        %v816 = vsel %vm613, %v811, 0
        %818 = vmatprep.subr.bf16.mxu0 0
        %819 = vmatpush1.bf16.xpose.msra.mxu0 %v816
        %820 = vmatprep.subr.bf16.mxu0 0
        %821 = vmatpush1.bf16.xpose.msra.mxu0 0
        %822 = vmatprep.subr.bf16.mxu0 0
        %823 = vmatpush1.bf16.xpose.msra.mxu0 0
        %824 = vmatprep.subr.bf16.mxu0 0
        %825 = vmatpush1.bf16.xpose.msra.mxu0 0
        %826 = vmatprep.subr.bf16.mxu0 0
        %827 = vmatpush1.bf16.xpose.msra.mxu0 0
        %828 = vmatprep.subr.bf16.mxu0 0
        %829 = vmatpush1.bf16.xpose.msra.mxu0 0
        %830 = vmatprep.subr.bf16.mxu0 0
        %831 = vmatpush1.bf16.xpose.msra.mxu0 0
        %832 = vmatprep.subr.bf16.mxu0 0
        %833 = vmatpush1.bf16.xpose.msra.mxu0 0
        %834 = vmatprep.subr.bf16.mxu0 0
        %835 = vmatpush1.bf16.xpose.msra.mxu0 0
        %836 = vmatprep.subr.bf16.mxu0 0
        %837 = vmatpush1.bf16.xpose.msra.mxu0 0
        %838 = vmatprep.subr.bf16.mxu0 0
        %839 = vmatpush1.bf16.xpose.msra.mxu0 0
        %840 = vmatprep.subr.bf16.mxu0 0
        %841 = vmatpush1.bf16.xpose.msra.mxu0 0
        %842 = vmatprep.subr.bf16.mxu0 0
        %843 = vmatpush1.bf16.xpose.msra.mxu0 0
        %844 = vmatprep.subr.bf16.mxu0 0
        %845 = vmatpush1.bf16.xpose.msra.mxu0 0
        %846 = vmatprep.subr.bf16.mxu0 0
        %847 = vmatpush1.bf16.xpose.msra.mxu0 0
        %848 = vmatprep.subr.bf16.mxu0 0
        %849 = vmatpush1.bf16.xpose.msra.mxu0 0
        %850 = vmatprep.mubr.bf16.mxu0 0
        %851 = vmatmul.mubr.bf16.gmra.mrb[0].mxu0 %v813
        %v852 = vpop.f32.mrb[0].mxu0
        %v853 = vadd.f32 0.0, %v852
        %v854 = vpop.f32.mrb[0].mxu0
        %v855 = vpop.f32.mrb[0].mxu0
        %v856 = vpop.f32.mrb[0].mxu0
        %857 = vdwg.mxu0
        %v858 = vunpack.c.l.b16 %v606
        %v859 = vpack.c.b16 %v858, %v858
        %860 = vrot.lane.b32.xlu0 %v859, 96
        %v861 = vpop.permute.xlu0 %860
        %v863 = vsel %vm613, %v606, 0
        %v866 = vsel %vm613, %v861, 0
        %868 = vmatprep.subr.bf16.mxu0 0
        %869 = vmatpush1.bf16.xpose.msra.mxu0 %v866
        %870 = vmatprep.subr.bf16.mxu0 0
        %871 = vmatpush1.bf16.xpose.msra.mxu0 0
        %872 = vmatprep.subr.bf16.mxu0 0
        %873 = vmatpush1.bf16.xpose.msra.mxu0 0
        %874 = vmatprep.subr.bf16.mxu0 0
        %875 = vmatpush1.bf16.xpose.msra.mxu0 0
        %876 = vmatprep.subr.bf16.mxu0 0
        %877 = vmatpush1.bf16.xpose.msra.mxu0 0
        %878 = vmatprep.subr.bf16.mxu0 0
        %879 = vmatpush1.bf16.xpose.msra.mxu0 0
        %880 = vmatprep.subr.bf16.mxu0 0
        %881 = vmatpush1.bf16.xpose.msra.mxu0 0
        %882 = vmatprep.subr.bf16.mxu0 0
        %883 = vmatpush1.bf16.xpose.msra.mxu0 0
        %884 = vmatprep.subr.bf16.mxu0 0
        %885 = vmatpush1.bf16.xpose.msra.mxu0 0
        %886 = vmatprep.subr.bf16.mxu0 0
        %887 = vmatpush1.bf16.xpose.msra.mxu0 0
        %888 = vmatprep.subr.bf16.mxu0 0
        %889 = vmatpush1.bf16.xpose.msra.mxu0 0
        %890 = vmatprep.subr.bf16.mxu0 0
        %891 = vmatpush1.bf16.xpose.msra.mxu0 0
        %892 = vmatprep.subr.bf16.mxu0 0
        %893 = vmatpush1.bf16.xpose.msra.mxu0 0
        %894 = vmatprep.subr.bf16.mxu0 0
        %895 = vmatpush1.bf16.xpose.msra.mxu0 0
        %896 = vmatprep.subr.bf16.mxu0 0
        %897 = vmatpush1.bf16.xpose.msra.mxu0 0
        %898 = vmatprep.subr.bf16.mxu0 0
        %899 = vmatpush1.bf16.xpose.msra.mxu0 0
        %900 = vmatprep.mubr.bf16.mxu0 0
        %901 = vmatmul.mubr.bf16.gmra.mrb[0].mxu0 %v863
        %v902 = vpop.f32.mrb[0].mxu0
        %v903 = vadd.f32 0.0, %v902
        %v904 = vpop.f32.mrb[0].mxu0
        %v905 = vpop.f32.mrb[0].mxu0
        %v906 = vpop.f32.mrb[0].mxu0
        %907 = vdwg.mxu0
        %v908 = vunpack.c.l.b16 %v608
        %v909 = vpack.c.b16 %v908, %v908
        %910 = vrot.lane.b32.xlu0 %v909, 96
        %v911 = vpop.permute.xlu0 %910
        %v913 = vsel %vm613, %v608, 0
        %v916 = vsel %vm613, %v911, 0
        %918 = vmatprep.subr.bf16.mxu0 0
        %919 = vmatpush1.bf16.xpose.msra.mxu0 %v916
        %920 = vmatprep.subr.bf16.mxu0 0
        %921 = vmatpush1.bf16.xpose.msra.mxu0 0
        %922 = vmatprep.subr.bf16.mxu0 0
        %923 = vmatpush1.bf16.xpose.msra.mxu0 0
        %924 = vmatprep.subr.bf16.mxu0 0
        %925 = vmatpush1.bf16.xpose.msra.mxu0 0
        %926 = vmatprep.subr.bf16.mxu0 0
        %927 = vmatpush1.bf16.xpose.msra.mxu0 0
        %928 = vmatprep.subr.bf16.mxu0 0
        %929 = vmatpush1.bf16.xpose.msra.mxu0 0
        %930 = vmatprep.subr.bf16.mxu0 0
        %931 = vmatpush1.bf16.xpose.msra.mxu0 0
        %932 = vmatprep.subr.bf16.mxu0 0
        %933 = vmatpush1.bf16.xpose.msra.mxu0 0
        %934 = vmatprep.subr.bf16.mxu0 0
        %935 = vmatpush1.bf16.xpose.msra.mxu0 0
        %936 = vmatprep.subr.bf16.mxu0 0
        %937 = vmatpush1.bf16.xpose.msra.mxu0 0
        %938 = vmatprep.subr.bf16.mxu0 0
        %939 = vmatpush1.bf16.xpose.msra.mxu0 0
        %940 = vmatprep.subr.bf16.mxu0 0
        %941 = vmatpush1.bf16.xpose.msra.mxu0 0
        %942 = vmatprep.subr.bf16.mxu0 0
        %943 = vmatpush1.bf16.xpose.msra.mxu0 0
        %944 = vmatprep.subr.bf16.mxu0 0
        %945 = vmatpush1.bf16.xpose.msra.mxu0 0
        %946 = vmatprep.subr.bf16.mxu0 0
        %947 = vmatpush1.bf16.xpose.msra.mxu0 0
        %948 = vmatprep.subr.bf16.mxu0 0
        %949 = vmatpush1.bf16.xpose.msra.mxu0 0
        %950 = vmatprep.mubr.bf16.mxu0 0
        %951 = vmatmul.mubr.bf16.gmra.mrb[0].mxu0 %v913
        %v952 = vpop.f32.mrb[0].mxu0
        %v953 = vadd.f32 0.0, %v952
        %v954 = vpop.f32.mrb[0].mxu0
        %v955 = vpop.f32.mrb[0].mxu0
        %v956 = vpop.f32.mrb[0].mxu0
        %957 = vdwg.mxu0
        %v958 = vunpack.c.l.b16 %v610
        %v959 = vpack.c.b16 %v958, %v958
        %960 = vrot.lane.b32.xlu0 %v959, 96
        %v961 = vpop.permute.xlu0 %960
        %v963 = vsel %vm613, %v610, 0
        %v966 = vsel %vm613, %v961, 0
        %968 = vmatprep.subr.bf16.mxu0 0
        %969 = vmatpush1.bf16.xpose.msra.mxu0 %v966
        %970 = vmatprep.subr.bf16.mxu0 0
        %971 = vmatpush1.bf16.xpose.msra.mxu0 0
        %972 = vmatprep.subr.bf16.mxu0 0
        %973 = vmatpush1.bf16.xpose.msra.mxu0 0
        %974 = vmatprep.subr.bf16.mxu0 0
        %975 = vmatpush1.bf16.xpose.msra.mxu0 0
        %976 = vmatprep.subr.bf16.mxu0 0
        %977 = vmatpush1.bf16.xpose.msra.mxu0 0
        %978 = vmatprep.subr.bf16.mxu0 0
        %979 = vmatpush1.bf16.xpose.msra.mxu0 0
        %980 = vmatprep.subr.bf16.mxu0 0
        %981 = vmatpush1.bf16.xpose.msra.mxu0 0
        %982 = vmatprep.subr.bf16.mxu0 0
        %983 = vmatpush1.bf16.xpose.msra.mxu0 0
        %984 = vmatprep.subr.bf16.mxu0 0
        %985 = vmatpush1.bf16.xpose.msra.mxu0 0
        %986 = vmatprep.subr.bf16.mxu0 0
        %987 = vmatpush1.bf16.xpose.msra.mxu0 0
        %988 = vmatprep.subr.bf16.mxu0 0
        %989 = vmatpush1.bf16.xpose.msra.mxu0 0
        %990 = vmatprep.subr.bf16.mxu0 0
        %991 = vmatpush1.bf16.xpose.msra.mxu0 0
        %992 = vmatprep.subr.bf16.mxu0 0
        %993 = vmatpush1.bf16.xpose.msra.mxu0 0
        %994 = vmatprep.subr.bf16.mxu0 0
        %995 = vmatpush1.bf16.xpose.msra.mxu0 0
        %996 = vmatprep.subr.bf16.mxu0 0
        %997 = vmatpush1.bf16.xpose.msra.mxu0 0
        %998 = vmatprep.subr.bf16.mxu0 0
        %999 = vmatpush1.bf16.xpose.msra.mxu0 0
        %1000 = vmatprep.mubr.bf16.mxu0 0
        %1001 = vmatmul.mubr.bf16.gmra.mrb[0].mxu0 %v963
        %v1002 = vpop.f32.mrb[0].mxu0
        %v1003 = vadd.f32 0.0, %v1002
        %v1004 = vpop.f32.mrb[0].mxu0
        %v1005 = vpop.f32.mrb[0].mxu0
        %v1006 = vpop.f32.mrb[0].mxu0
        %1007 = vdwg.mxu0
        %v1008 = vmul.f32 %v655, 0.35355338
        %v1009 = vmul.f32 %v703, 0.35355338
        %v1010 = vmul.f32 %v753, 0.35355338
        %v1011 = vmul.f32 %v803, 0.35355338
        %v1012 = vmul.f32 %v853, 0.35355338
        %v1013 = vmul.f32 %v903, 0.35355338
        %v1014 = vmul.f32 %v953, 0.35355338
        %v1015 = vmul.f32 %v1003, 0.35355338
        %v1016 = vsel %vm613, %v1008, -inf
        %1017 = vmax.xlane.f32.xlu0 %v1016
        %v1018 = vpop.xlane.xlu0 %1017
        %v1019 = vsel %vm613, %v1009, -inf
        %1020 = vmax.xlane.f32.xlu0 %v1019
        %v1021 = vpop.xlane.xlu0 %1020
        %v1022 = vsel %vm613, %v1010, -inf
        %1023 = vmax.xlane.f32.xlu0 %v1022
        %v1024 = vpop.xlane.xlu0 %1023
        %v1025 = vsel %vm613, %v1011, -inf
        %1026 = vmax.xlane.f32.xlu0 %v1025
        %v1027 = vpop.xlane.xlu0 %1026
        %v1028 = vsel %vm613, %v1012, -inf
        %1029 = vmax.xlane.f32.xlu0 %v1028
        %v1030 = vpop.xlane.xlu0 %1029
        %v1031 = vsel %vm613, %v1013, -inf
        %1032 = vmax.xlane.f32.xlu0 %v1031
        %v1033 = vpop.xlane.xlu0 %1032
        %v1034 = vsel %vm613, %v1014, -inf
        %1035 = vmax.xlane.f32.xlu0 %v1034
        %v1036 = vpop.xlane.xlu0 %1035
        %v1037 = vsel %vm613, %v1015, -inf
        %1038 = vmax.xlane.f32.xlu0 %v1037
        %v1039 = vpop.xlane.xlu0 %1038
        %v1040 = vsub.f32 %v1008, %v1018
        %v1041 = vsub.f32 %v1009, %v1021
        %v1042 = vsub.f32 %v1010, %v1024
        %v1043 = vsub.f32 %v1011, %v1027
        %v1044 = vsub.f32 %v1012, %v1030
        %v1045 = vsub.f32 %v1013, %v1033
        %v1046 = vsub.f32 %v1014, %v1036
        %v1047 = vsub.f32 %v1015, %v1039
        %v1048 = vmul.f32 %v1040, 1.442695
        %v1049 = vpow.pop %v1048
        %v1050 = vmul.f32 %v1041, 1.442695
        %v1051 = vpow.pop %v1050
        %v1052 = vmul.f32 %v1042, 1.442695
        %v1053 = vpow.pop %v1052
        %v1054 = vmul.f32 %v1043, 1.442695
        %v1055 = vpow.pop %v1054
        %v1056 = vmul.f32 %v1044, 1.442695
        %v1057 = vpow.pop %v1056
        %v1058 = vmul.f32 %v1045, 1.442695
        %v1059 = vpow.pop %v1058
        %v1060 = vmul.f32 %v1046, 1.442695
        %v1061 = vpow.pop %v1060
        %v1062 = vmul.f32 %v1047, 1.442695
        %v1063 = vpow.pop %v1062
        %v1064 = vsel %vm613, %v1049, 0.0
        %1065 = vadd.xlane.f32.xlu0 %v1064
        %v1066 = vpop.xlane.xlu0 %1065
        %v1067 = vsel %vm613, %v1051, 0.0
        %1068 = vadd.xlane.f32.xlu0 %v1067
        %v1069 = vpop.xlane.xlu0 %1068
        %v1070 = vsel %vm613, %v1053, 0.0
        %1071 = vadd.xlane.f32.xlu0 %v1070
        %v1072 = vpop.xlane.xlu0 %1071
        %v1073 = vsel %vm613, %v1055, 0.0
        %1074 = vadd.xlane.f32.xlu0 %v1073
        %v1075 = vpop.xlane.xlu0 %1074
        %v1076 = vsel %vm613, %v1057, 0.0
        %1077 = vadd.xlane.f32.xlu0 %v1076
        %v1078 = vpop.xlane.xlu0 %1077
        %v1079 = vsel %vm613, %v1059, 0.0
        %1080 = vadd.xlane.f32.xlu0 %v1079
        %v1081 = vpop.xlane.xlu0 %1080
        %v1082 = vsel %vm613, %v1061, 0.0
        %1083 = vadd.xlane.f32.xlu0 %v1082
        %v1084 = vpop.xlane.xlu0 %1083
        %v1085 = vsel %vm613, %v1063, 0.0
        %1086 = vadd.xlane.f32.xlu0 %v1085
        %v1087 = vpop.xlane.xlu0 %1086
        %v1088 = vrcp.pop %v1066
        %v1089 = vrcp.pop %v1069
        %v1090 = vrcp.pop %v1072
        %v1091 = vrcp.pop %v1075
        %v1092 = vrcp.pop %v1078
        %v1093 = vrcp.pop %v1081
        %v1094 = vrcp.pop %v1084
        %v1095 = vrcp.pop %v1087
        %v1096 = vmul.f32 %v1049, %v1088
        %v1097 = vmul.f32 %v1051, %v1089
        %v1098 = vmul.f32 %v1053, %v1090
        %v1099 = vmul.f32 %v1055, %v1091
        %v1100 = vmul.f32 %v1057, %v1092
        %v1101 = vmul.f32 %v1059, %v1093
        %v1102 = vmul.f32 %v1061, %v1094
        %v1103 = vmul.f32 %v1063, %v1095
        %v1104 = vpack.c.bf16 %v1096, %v1096
        %v1105 = vpack.c.bf16 %v1097, %v1097
        %v1106 = vpack.c.bf16 %v1098, %v1098
        %v1107 = vpack.c.bf16 %v1099, %v1099
        %v1108 = vpack.c.bf16 %v1100, %v1100
        %v1109 = vpack.c.bf16 %v1101, %v1101
        %v1110 = vpack.c.bf16 %v1102, %v1102
        %v1111 = vpack.c.bf16 %v1103, %v1103
        %1112 = vrot.lane.b32.xlu0 %v597, 64
        %v1113 = vpop.permute.xlu0 %1112
        %v1115 = vsel %vm613, %v1104, 0
        %vm1117 = vcmask 1043456
        %v1119 = vsel %vm1117, %v1113, 0
        %1121 = vmatprep.subr.bf16.mxu0 0
        %1122 = vmatpush1.bf16.msra.mxu0 %v1119
        %1123 = vmatprep.subr.bf16.mxu0 0
        %1124 = vmatpush1.bf16.msra.mxu0 0
        %1125 = vmatprep.subr.bf16.mxu0 0
        %1126 = vmatpush1.bf16.msra.mxu0 0
        %1127 = vmatprep.subr.bf16.mxu0 0
        %1128 = vmatpush1.bf16.msra.mxu0 0
        %1129 = vmatprep.subr.bf16.mxu0 0
        %1130 = vmatpush1.bf16.msra.mxu0 0
        %1131 = vmatprep.subr.bf16.mxu0 0
        %1132 = vmatpush1.bf16.msra.mxu0 0
        %1133 = vmatprep.subr.bf16.mxu0 0
        %1134 = vmatpush1.bf16.msra.mxu0 0
        %1135 = vmatprep.subr.bf16.mxu0 0
        %1136 = vmatpush1.bf16.msra.mxu0 0
        %1137 = vmatprep.subr.bf16.mxu0 0
        %1138 = vmatpush1.bf16.msra.mxu0 0
        %1139 = vmatprep.subr.bf16.mxu0 0
        %1140 = vmatpush1.bf16.msra.mxu0 0
        %1141 = vmatprep.subr.bf16.mxu0 0
        %1142 = vmatpush1.bf16.msra.mxu0 0
        %1143 = vmatprep.subr.bf16.mxu0 0
        %1144 = vmatpush1.bf16.msra.mxu0 0
        %1145 = vmatprep.subr.bf16.mxu0 0
        %1146 = vmatpush1.bf16.msra.mxu0 0
        %1147 = vmatprep.subr.bf16.mxu0 0
        %1148 = vmatpush1.bf16.msra.mxu0 0
        %1149 = vmatprep.subr.bf16.mxu0 0
        %1150 = vmatpush1.bf16.msra.mxu0 0
        %1151 = vmatprep.subr.bf16.mxu0 0
        %1152 = vmatpush1.bf16.msra.mxu0 0
        %1153 = vmatprep.mubr.bf16.mxu0 0
        %1154 = vmatmul.mubr.bf16.gmra.mrb[0].mxu0 %v1115
        %v1155 = vpop.f32.mrb[0].mxu0
        %v1156 = vadd.f32 0.0, %v1155
        %v1157 = vpop.f32.mrb[0].mxu0
        %v1158 = vpop.f32.mrb[0].mxu0
        %v1159 = vpop.f32.mrb[0].mxu0
        %1160 = vdwg.mxu0
        %1161 = vrot.lane.b32.xlu0 %v598, 64
        %v1162 = vpop.permute.xlu0 %1161
        %v1164 = vsel %vm613, %v1105, 0
        %v1167 = vsel %vm1117, %v1162, 0
        %1169 = vmatprep.subr.bf16.mxu0 0
        %1170 = vmatpush1.bf16.msra.mxu0 %v1167
        %1171 = vmatprep.subr.bf16.mxu0 0
        %1172 = vmatpush1.bf16.msra.mxu0 0
        %1173 = vmatprep.subr.bf16.mxu0 0
        %1174 = vmatpush1.bf16.msra.mxu0 0
        %1175 = vmatprep.subr.bf16.mxu0 0
        %1176 = vmatpush1.bf16.msra.mxu0 0
        %1177 = vmatprep.subr.bf16.mxu0 0
        %1178 = vmatpush1.bf16.msra.mxu0 0
        %1179 = vmatprep.subr.bf16.mxu0 0
        %1180 = vmatpush1.bf16.msra.mxu0 0
        %1181 = vmatprep.subr.bf16.mxu0 0
        %1182 = vmatpush1.bf16.msra.mxu0 0
        %1183 = vmatprep.subr.bf16.mxu0 0
        %1184 = vmatpush1.bf16.msra.mxu0 0
        %1185 = vmatprep.subr.bf16.mxu0 0
        %1186 = vmatpush1.bf16.msra.mxu0 0
        %1187 = vmatprep.subr.bf16.mxu0 0
        %1188 = vmatpush1.bf16.msra.mxu0 0
        %1189 = vmatprep.subr.bf16.mxu0 0
        %1190 = vmatpush1.bf16.msra.mxu0 0
        %1191 = vmatprep.subr.bf16.mxu0 0
        %1192 = vmatpush1.bf16.msra.mxu0 0
        %1193 = vmatprep.subr.bf16.mxu0 0
        %1194 = vmatpush1.bf16.msra.mxu0 0
        %1195 = vmatprep.subr.bf16.mxu0 0
        %1196 = vmatpush1.bf16.msra.mxu0 0
        %1197 = vmatprep.subr.bf16.mxu0 0
        %1198 = vmatpush1.bf16.msra.mxu0 0
        %1199 = vmatprep.subr.bf16.mxu0 0
        %1200 = vmatpush1.bf16.msra.mxu0 0
        %1201 = vmatprep.mubr.bf16.mxu0 0
        %1202 = vmatmul.mubr.bf16.gmra.mrb[0].mxu0 %v1164
        %v1203 = vpop.f32.mrb[0].mxu0
        %v1204 = vadd.f32 0.0, %v1203
        %v1205 = vpop.f32.mrb[0].mxu0
        %v1206 = vpop.f32.mrb[0].mxu0
        %v1207 = vpop.f32.mrb[0].mxu0
        %1208 = vdwg.mxu0
        %1209 = vrot.lane.b32.xlu0 %v709, 64
        %v1210 = vpop.permute.xlu0 %1209
        %v1212 = vsel %vm613, %v1106, 0
        %v1215 = vsel %vm1117, %v1210, 0
        %1217 = vmatprep.subr.bf16.mxu0 0
        %1218 = vmatpush1.bf16.msra.mxu0 %v1215
        %1219 = vmatprep.subr.bf16.mxu0 0
        %1220 = vmatpush1.bf16.msra.mxu0 0
        %1221 = vmatprep.subr.bf16.mxu0 0
        %1222 = vmatpush1.bf16.msra.mxu0 0
        %1223 = vmatprep.subr.bf16.mxu0 0
        %1224 = vmatpush1.bf16.msra.mxu0 0
        %1225 = vmatprep.subr.bf16.mxu0 0
        %1226 = vmatpush1.bf16.msra.mxu0 0
        %1227 = vmatprep.subr.bf16.mxu0 0
        %1228 = vmatpush1.bf16.msra.mxu0 0
        %1229 = vmatprep.subr.bf16.mxu0 0
        %1230 = vmatpush1.bf16.msra.mxu0 0
        %1231 = vmatprep.subr.bf16.mxu0 0
        %1232 = vmatpush1.bf16.msra.mxu0 0
        %1233 = vmatprep.subr.bf16.mxu0 0
        %1234 = vmatpush1.bf16.msra.mxu0 0
        %1235 = vmatprep.subr.bf16.mxu0 0
        %1236 = vmatpush1.bf16.msra.mxu0 0
        %1237 = vmatprep.subr.bf16.mxu0 0
        %1238 = vmatpush1.bf16.msra.mxu0 0
        %1239 = vmatprep.subr.bf16.mxu0 0
        %1240 = vmatpush1.bf16.msra.mxu0 0
        %1241 = vmatprep.subr.bf16.mxu0 0
        %1242 = vmatpush1.bf16.msra.mxu0 0
        %1243 = vmatprep.subr.bf16.mxu0 0
        %1244 = vmatpush1.bf16.msra.mxu0 0
        %1245 = vmatprep.subr.bf16.mxu0 0
        %1246 = vmatpush1.bf16.msra.mxu0 0
        %1247 = vmatprep.subr.bf16.mxu0 0
        %1248 = vmatpush1.bf16.msra.mxu0 0
        %1249 = vmatprep.mubr.bf16.mxu0 0
        %1250 = vmatmul.mubr.bf16.gmra.mrb[0].mxu0 %v1212
        %v1251 = vpop.f32.mrb[0].mxu0
        %v1252 = vadd.f32 0.0, %v1251
        %v1253 = vpop.f32.mrb[0].mxu0
        %v1254 = vpop.f32.mrb[0].mxu0
        %v1255 = vpop.f32.mrb[0].mxu0
        %1256 = vdwg.mxu0
        %1257 = vrot.lane.b32.xlu0 %v759, 64
        %v1258 = vpop.permute.xlu0 %1257
        %v1260 = vsel %vm613, %v1107, 0
        %v1263 = vsel %vm1117, %v1258, 0
        %1265 = vmatprep.subr.bf16.mxu0 0
        %1266 = vmatpush1.bf16.msra.mxu0 %v1263
        %1267 = vmatprep.subr.bf16.mxu0 0
        %1268 = vmatpush1.bf16.msra.mxu0 0
        %1269 = vmatprep.subr.bf16.mxu0 0
        %1270 = vmatpush1.bf16.msra.mxu0 0
        %1271 = vmatprep.subr.bf16.mxu0 0
        %1272 = vmatpush1.bf16.msra.mxu0 0
        %1273 = vmatprep.subr.bf16.mxu0 0
        %1274 = vmatpush1.bf16.msra.mxu0 0
        %1275 = vmatprep.subr.bf16.mxu0 0
        %1276 = vmatpush1.bf16.msra.mxu0 0
        %1277 = vmatprep.subr.bf16.mxu0 0
        %1278 = vmatpush1.bf16.msra.mxu0 0
        %1279 = vmatprep.subr.bf16.mxu0 0
        %1280 = vmatpush1.bf16.msra.mxu0 0
        %1281 = vmatprep.subr.bf16.mxu0 0
        %1282 = vmatpush1.bf16.msra.mxu0 0
        %1283 = vmatprep.subr.bf16.mxu0 0
        %1284 = vmatpush1.bf16.msra.mxu0 0
        %1285 = vmatprep.subr.bf16.mxu0 0
        %1286 = vmatpush1.bf16.msra.mxu0 0
        %1287 = vmatprep.subr.bf16.mxu0 0
        %1288 = vmatpush1.bf16.msra.mxu0 0
        %1289 = vmatprep.subr.bf16.mxu0 0
        %1290 = vmatpush1.bf16.msra.mxu0 0
        %1291 = vmatprep.subr.bf16.mxu0 0
        %1292 = vmatpush1.bf16.msra.mxu0 0
        %1293 = vmatprep.subr.bf16.mxu0 0
        %1294 = vmatpush1.bf16.msra.mxu0 0
        %1295 = vmatprep.subr.bf16.mxu0 0
        %1296 = vmatpush1.bf16.msra.mxu0 0
        %1297 = vmatprep.mubr.bf16.mxu0 0
        %1298 = vmatmul.mubr.bf16.gmra.mrb[0].mxu0 %v1260
        %v1299 = vpop.f32.mrb[0].mxu0
        %v1300 = vadd.f32 0.0, %v1299
        %v1301 = vpop.f32.mrb[0].mxu0
        %v1302 = vpop.f32.mrb[0].mxu0
        %v1303 = vpop.f32.mrb[0].mxu0
        %1304 = vdwg.mxu0
        %1305 = vrot.lane.b32.xlu0 %v809, 64
        %v1306 = vpop.permute.xlu0 %1305
        %v1308 = vsel %vm613, %v1108, 0
        %v1311 = vsel %vm1117, %v1306, 0
        %1313 = vmatprep.subr.bf16.mxu0 0
        %1314 = vmatpush1.bf16.msra.mxu0 %v1311
        %1315 = vmatprep.subr.bf16.mxu0 0
        %1316 = vmatpush1.bf16.msra.mxu0 0
        %1317 = vmatprep.subr.bf16.mxu0 0
        %1318 = vmatpush1.bf16.msra.mxu0 0
        %1319 = vmatprep.subr.bf16.mxu0 0
        %1320 = vmatpush1.bf16.msra.mxu0 0
        %1321 = vmatprep.subr.bf16.mxu0 0
        %1322 = vmatpush1.bf16.msra.mxu0 0
        %1323 = vmatprep.subr.bf16.mxu0 0
        %1324 = vmatpush1.bf16.msra.mxu0 0
        %1325 = vmatprep.subr.bf16.mxu0 0
        %1326 = vmatpush1.bf16.msra.mxu0 0
        %1327 = vmatprep.subr.bf16.mxu0 0
        %1328 = vmatpush1.bf16.msra.mxu0 0
        %1329 = vmatprep.subr.bf16.mxu0 0
        %1330 = vmatpush1.bf16.msra.mxu0 0
        %1331 = vmatprep.subr.bf16.mxu0 0
        %1332 = vmatpush1.bf16.msra.mxu0 0
        %1333 = vmatprep.subr.bf16.mxu0 0
        %1334 = vmatpush1.bf16.msra.mxu0 0
        %1335 = vmatprep.subr.bf16.mxu0 0
        %1336 = vmatpush1.bf16.msra.mxu0 0
        %1337 = vmatprep.subr.bf16.mxu0 0
        %1338 = vmatpush1.bf16.msra.mxu0 0
        %1339 = vmatprep.subr.bf16.mxu0 0
        %1340 = vmatpush1.bf16.msra.mxu0 0
        %1341 = vmatprep.subr.bf16.mxu0 0
        %1342 = vmatpush1.bf16.msra.mxu0 0
        %1343 = vmatprep.subr.bf16.mxu0 0
        %1344 = vmatpush1.bf16.msra.mxu0 0
        %1345 = vmatprep.mubr.bf16.mxu0 0
        %1346 = vmatmul.mubr.bf16.gmra.mrb[0].mxu0 %v1308
        %v1347 = vpop.f32.mrb[0].mxu0
        %v1348 = vadd.f32 0.0, %v1347
        %v1349 = vpop.f32.mrb[0].mxu0
        %v1350 = vpop.f32.mrb[0].mxu0
        %v1351 = vpop.f32.mrb[0].mxu0
        %1352 = vdwg.mxu0
        %1353 = vrot.lane.b32.xlu0 %v859, 64
        %v1354 = vpop.permute.xlu0 %1353
        %v1356 = vsel %vm613, %v1109, 0
        %v1359 = vsel %vm1117, %v1354, 0
        %1361 = vmatprep.subr.bf16.mxu0 0
        %1362 = vmatpush1.bf16.msra.mxu0 %v1359
        %1363 = vmatprep.subr.bf16.mxu0 0
        %1364 = vmatpush1.bf16.msra.mxu0 0
        %1365 = vmatprep.subr.bf16.mxu0 0
        %1366 = vmatpush1.bf16.msra.mxu0 0
        %1367 = vmatprep.subr.bf16.mxu0 0
        %1368 = vmatpush1.bf16.msra.mxu0 0
        %1369 = vmatprep.subr.bf16.mxu0 0
        %1370 = vmatpush1.bf16.msra.mxu0 0
        %1371 = vmatprep.subr.bf16.mxu0 0
        %1372 = vmatpush1.bf16.msra.mxu0 0
        %1373 = vmatprep.subr.bf16.mxu0 0
        %1374 = vmatpush1.bf16.msra.mxu0 0
        %1375 = vmatprep.subr.bf16.mxu0 0
        %1376 = vmatpush1.bf16.msra.mxu0 0
        %1377 = vmatprep.subr.bf16.mxu0 0
        %1378 = vmatpush1.bf16.msra.mxu0 0
        %1379 = vmatprep.subr.bf16.mxu0 0
        %1380 = vmatpush1.bf16.msra.mxu0 0
        %1381 = vmatprep.subr.bf16.mxu0 0
        %1382 = vmatpush1.bf16.msra.mxu0 0
        %1383 = vmatprep.subr.bf16.mxu0 0
        %1384 = vmatpush1.bf16.msra.mxu0 0
        %1385 = vmatprep.subr.bf16.mxu0 0
        %1386 = vmatpush1.bf16.msra.mxu0 0
        %1387 = vmatprep.subr.bf16.mxu0 0
        %1388 = vmatpush1.bf16.msra.mxu0 0
        %1389 = vmatprep.subr.bf16.mxu0 0
        %1390 = vmatpush1.bf16.msra.mxu0 0
        %1391 = vmatprep.subr.bf16.mxu0 0
        %1392 = vmatpush1.bf16.msra.mxu0 0
        %1393 = vmatprep.mubr.bf16.mxu0 0
        %1394 = vmatmul.mubr.bf16.gmra.mrb[0].mxu0 %v1356
        %v1395 = vpop.f32.mrb[0].mxu0
        %v1396 = vadd.f32 0.0, %v1395
        %v1397 = vpop.f32.mrb[0].mxu0
        %v1398 = vpop.f32.mrb[0].mxu0
        %v1399 = vpop.f32.mrb[0].mxu0
        %1400 = vdwg.mxu0
        %1401 = vrot.lane.b32.xlu0 %v909, 64
        %v1402 = vpop.permute.xlu0 %1401
        %v1404 = vsel %vm613, %v1110, 0
        %v1407 = vsel %vm1117, %v1402, 0
        %1409 = vmatprep.subr.bf16.mxu0 0
        %1410 = vmatpush1.bf16.msra.mxu0 %v1407
        %1411 = vmatprep.subr.bf16.mxu0 0
        %1412 = vmatpush1.bf16.msra.mxu0 0
        %1413 = vmatprep.subr.bf16.mxu0 0
        %1414 = vmatpush1.bf16.msra.mxu0 0
        %1415 = vmatprep.subr.bf16.mxu0 0
        %1416 = vmatpush1.bf16.msra.mxu0 0
        %1417 = vmatprep.subr.bf16.mxu0 0
        %1418 = vmatpush1.bf16.msra.mxu0 0
        %1419 = vmatprep.subr.bf16.mxu0 0
        %1420 = vmatpush1.bf16.msra.mxu0 0
        %1421 = vmatprep.subr.bf16.mxu0 0
        %1422 = vmatpush1.bf16.msra.mxu0 0
        %1423 = vmatprep.subr.bf16.mxu0 0
        %1424 = vmatpush1.bf16.msra.mxu0 0
        %1425 = vmatprep.subr.bf16.mxu0 0
        %1426 = vmatpush1.bf16.msra.mxu0 0
        %1427 = vmatprep.subr.bf16.mxu0 0
        %1428 = vmatpush1.bf16.msra.mxu0 0
        %1429 = vmatprep.subr.bf16.mxu0 0
        %1430 = vmatpush1.bf16.msra.mxu0 0
        %1431 = vmatprep.subr.bf16.mxu0 0
        %1432 = vmatpush1.bf16.msra.mxu0 0
        %1433 = vmatprep.subr.bf16.mxu0 0
        %1434 = vmatpush1.bf16.msra.mxu0 0
        %1435 = vmatprep.subr.bf16.mxu0 0
        %1436 = vmatpush1.bf16.msra.mxu0 0
        %1437 = vmatprep.subr.bf16.mxu0 0
        %1438 = vmatpush1.bf16.msra.mxu0 0
        %1439 = vmatprep.subr.bf16.mxu0 0
        %1440 = vmatpush1.bf16.msra.mxu0 0
        %1441 = vmatprep.mubr.bf16.mxu0 0
        %1442 = vmatmul.mubr.bf16.gmra.mrb[0].mxu0 %v1404
        %v1443 = vpop.f32.mrb[0].mxu0
        %v1444 = vadd.f32 0.0, %v1443
        %v1445 = vpop.f32.mrb[0].mxu0
        %v1446 = vpop.f32.mrb[0].mxu0
        %v1447 = vpop.f32.mrb[0].mxu0
        %1448 = vdwg.mxu0
        %1449 = vrot.lane.b32.xlu0 %v959, 64
        %v1450 = vpop.permute.xlu0 %1449
        %v1452 = vsel %vm613, %v1111, 0
        %v1455 = vsel %vm1117, %v1450, 0
        %1457 = vmatprep.subr.bf16.mxu0 0
        %1458 = vmatpush1.bf16.msra.mxu0 %v1455
        %1459 = vmatprep.subr.bf16.mxu0 0
        %1460 = vmatpush1.bf16.msra.mxu0 0
        %1461 = vmatprep.subr.bf16.mxu0 0
        %1462 = vmatpush1.bf16.msra.mxu0 0
        %1463 = vmatprep.subr.bf16.mxu0 0
        %1464 = vmatpush1.bf16.msra.mxu0 0
        %1465 = vmatprep.subr.bf16.mxu0 0
        %1466 = vmatpush1.bf16.msra.mxu0 0
        %1467 = vmatprep.subr.bf16.mxu0 0
        %1468 = vmatpush1.bf16.msra.mxu0 0
        %1469 = vmatprep.subr.bf16.mxu0 0
        %1470 = vmatpush1.bf16.msra.mxu0 0
        %1471 = vmatprep.subr.bf16.mxu0 0
        %1472 = vmatpush1.bf16.msra.mxu0 0
        %1473 = vmatprep.subr.bf16.mxu0 0
        %1474 = vmatpush1.bf16.msra.mxu0 0
        %1475 = vmatprep.subr.bf16.mxu0 0
        %1476 = vmatpush1.bf16.msra.mxu0 0
        %1477 = vmatprep.subr.bf16.mxu0 0
        %1478 = vmatpush1.bf16.msra.mxu0 0
        %1479 = vmatprep.subr.bf16.mxu0 0
        %1480 = vmatpush1.bf16.msra.mxu0 0
        %1481 = vmatprep.subr.bf16.mxu0 0
        %1482 = vmatpush1.bf16.msra.mxu0 0
        %1483 = vmatprep.subr.bf16.mxu0 0
        %1484 = vmatpush1.bf16.msra.mxu0 0
        %1485 = vmatprep.subr.bf16.mxu0 0
        %1486 = vmatpush1.bf16.msra.mxu0 0
        %1487 = vmatprep.subr.bf16.mxu0 0
        %1488 = vmatpush1.bf16.msra.mxu0 0
        %1489 = vmatprep.mubr.bf16.mxu0 0
        %1490 = vmatmul.mubr.bf16.gmra.mrb[0].mxu0 %v1452
        %v1491 = vpop.f32.mrb[0].mxu0
        %v1492 = vadd.f32 0.0, %v1491
        %v1493 = vpop.f32.mrb[0].mxu0
        %v1494 = vpop.f32.mrb[0].mxu0
        %v1495 = vpop.f32.mrb[0].mxu0
        %1496 = vdwg.mxu0
        %v1497 = vpack.c.bf16 %v1156, %v1156
        %v1498 = vpack.c.bf16 %v1204, %v1204
        %v1499 = vpack.c.bf16 %v1252, %v1252
        %v1500 = vpack.c.bf16 %v1300, %v1300
        %v1501 = vpack.c.bf16 %v1348, %v1348
        %v1502 = vpack.c.bf16 %v1396, %v1396
        %v1503 = vpack.c.bf16 %v1444, %v1444
        %v1504 = vpack.c.bf16 %v1492, %v1492
        %1507 = vrot.lane.b32.xlu0 %v1499, 8
        %v1508 = vpop.permute.xlu0 %1507
        %1509 = vrot.lane.b32.xlu0 %v1500, 8
        %v1510 = vpop.permute.xlu0 %1509
        %1513 = vrot.lane.b32.xlu0 %v1501, 16
        %v1514 = vpop.permute.xlu0 %1513
        %1515 = vrot.lane.b32.xlu0 %v1502, 16
        %v1516 = vpop.permute.xlu0 %1515
        %1519 = vrot.lane.b32.xlu0 %v1503, 24
        %v1520 = vpop.permute.xlu0 %1519
        %1521 = vrot.lane.b32.xlu0 %v1504, 24
        %v1522 = vpop.permute.xlu0 %1521
        %v1525 = vsel %vm613, %v1497, %v1508
        %v1528 = vsel %vm613, %v1498, %v1510
        %vm1529 = vcmask 130048
        %v1531 = vsel %vm1529, %v1525, %v1514
        %v1533 = vsel %vm1529, %v1528, %v1516
        %vm1534 = vcmask 195584
        %v1536 = vsel %vm1534, %v1531, %v1520
        %v1538 = vsel %vm1534, %v1533, %v1522
        %v1539 = vld [vmem:[%s456] sm:$0xf]
        %v1540 = vld [vmem:[%s456 + $0x4] sm:$0xf]
        %v1541 = vld [vmem:[%s456 + $0x8] sm:$0xf]
        %v1542 = vld [vmem:[%s456 + $0xc] sm:$0xf]
        %v1543 = vld [vmem:[%s459] sm:$0x1]
        %v1545 = vlaneseq
        %v1546 = vshrl.u32 %v1545, 7
        %v1547 = vsub.s32 0, %v1546
        %v1548 = vrot.slane %v1543, %v1547
        %v1552 = vunpack.c.l.b16 %v1536
        %v1553 = vunpack.c.l.b16 %v1538
        %v1554 = vpack.c.b16 %v1553, %v1552
        %v1559 = vunpack.c.l.b16 %v1539
        %v1560 = vunpack.c.l.b16 %v1540
        %v1561 = vunpack.c.l.b16 %v1541
        %v1562 = vunpack.c.l.b16 %v1542
        %v1563 = vpack.c.b16 %v1560, %v1559
        %v1564 = vpack.c.b16 %v1562, %v1561
        %v1568 = vsel %vm491, %v1554, 0
        %1570 = vmatprep.subr.bf16.mxu0 0
        %1571 = vmatpush1.bf16.msra.mxu0 %v1563
        %1572 = vmatprep.subr.bf16.mxu0 0
        %1573 = vmatpush1.bf16.msra.mxu0 %v1564
        %1574 = vmatprep.subr.bf16.mxu0 0
        %1575 = vmatpush1.bf16.msra.mxu0 0
        %1576 = vmatprep.subr.bf16.mxu0 0
        %1577 = vmatpush1.bf16.msra.mxu0 0
        %1578 = vmatprep.subr.bf16.mxu0 0
        %1579 = vmatpush1.bf16.msra.mxu0 0
        %1580 = vmatprep.subr.bf16.mxu0 0
        %1581 = vmatpush1.bf16.msra.mxu0 0
        %1582 = vmatprep.subr.bf16.mxu0 0
        %1583 = vmatpush1.bf16.msra.mxu0 0
        %1584 = vmatprep.subr.bf16.mxu0 0
        %1585 = vmatpush1.bf16.msra.mxu0 0
        %1586 = vmatprep.subr.bf16.mxu0 0
        %1587 = vmatpush1.bf16.msra.mxu0 0
        %1588 = vmatprep.subr.bf16.mxu0 0
        %1589 = vmatpush1.bf16.msra.mxu0 0
        %1590 = vmatprep.subr.bf16.mxu0 0
        %1591 = vmatpush1.bf16.msra.mxu0 0
        %1592 = vmatprep.subr.bf16.mxu0 0
        %1593 = vmatpush1.bf16.msra.mxu0 0
        %1594 = vmatprep.subr.bf16.mxu0 0
        %1595 = vmatpush1.bf16.msra.mxu0 0
        %1596 = vmatprep.subr.bf16.mxu0 0
        %1597 = vmatpush1.bf16.msra.mxu0 0
        %1598 = vmatprep.subr.bf16.mxu0 0
        %1599 = vmatpush1.bf16.msra.mxu0 0
        %1600 = vmatprep.subr.bf16.mxu0 0
        %1601 = vmatpush1.bf16.msra.mxu0 0
        %1602 = vmatprep.mubr.bf16.mxu0 0
        %1603 = vmatmul.mubr.bf16.gmra.mrb[0].mxu0 %v1568
        %v1604 = vpop.f32.mrb[0].mxu0
        %v1605 = vadd.f32 %v1548, %v1604
        %v1606 = vpop.f32.mrb[0].mxu0
        %v1607 = vpop.f32.mrb[0].mxu0
        %v1608 = vadd.f32 %v1548, %v1607
        %v1609 = vpop.f32.mrb[0].mxu0
        %1610 = vdwg.mxu0
        %v1611 = vadd.f32 %v489, %v1605
        %v1612 = vadd.f32 %v490, %v1608
        %v1613 = vsel %vm491, %v1611, 0.0
        %1614 = vadd.xlane.f32.xlu0 %v1613
        %v1615 = vpop.xlane.xlu0 %1614
        %v1616 = vsel %vm491, %v1612, 0.0
        %1617 = vadd.xlane.f32.xlu0 %v1616
        %v1618 = vpop.xlane.xlu0 %1617
        %v1619 = vmul.f32 %v1615, %v498
        %v1620 = vmul.f32 %v1618, %v498
        %v1621 = vsub.f32 %v1611, %v1619
        %v1622 = vsub.f32 %v1612, %v1620
        %v1623 = vmul.f32 %v1621, %v1621
        %v1624 = vmul.f32 %v1622, %v1622
        %v1625 = vsel %vm491, %v1623, 0.0
        %1626 = vadd.xlane.f32.xlu0 %v1625
        %v1627 = vpop.xlane.xlu0 %1626
        %v1628 = vsel %vm491, %v1624, 0.0
        %1629 = vadd.xlane.f32.xlu0 %v1628
        %v1630 = vpop.xlane.xlu0 %1629
        %v1631 = vmul.f32 %v1627, %v498
        %v1632 = vmul.f32 %v1630, %v498
        %v1633 = vadd.f32 %v1631, 1e-12
        %v1634 = vadd.f32 %v1632, 1e-12
        %v1635 = vrsqrt.pop %v1633
        %v1636 = vrsqrt.pop %v1634
        %v1637 = vmul.f32 %v1621, %v1635
        %v1638 = vmul.f32 %v1622, %v1636
        %v1639 = vpack.c.bf16 %v1637, %v1637
        %v1640 = vpack.c.bf16 %v1638, %v1638
        %v1641 = vld [vmem:[%s464] sm:$0xf]
        %v1642 = vld [vmem:[%s464 + $0x4] sm:$0xf]
        %v1643 = vld [vmem:[%s464 + $0x8] sm:$0xf]
        %v1644 = vld [vmem:[%s464 + $0xc] sm:$0xf]
        %v1645 = vld [vmem:[%s467] sm:$0x1]
        %v1647 = vlaneseq
        %v1648 = vshrl.u32 %v1647, 7
        %v1649 = vsub.s32 0, %v1648
        %v1650 = vrot.slane %v1645, %v1649
        %v1654 = vunpack.c.l.b16 %v1639
        %v1655 = vunpack.c.l.b16 %v1640
        %v1656 = vpack.c.b16 %v1655, %v1654
        %v1661 = vunpack.c.l.b16 %v1641
        %v1662 = vunpack.c.l.b16 %v1642
        %v1663 = vunpack.c.l.b16 %v1643
        %v1664 = vunpack.c.l.b16 %v1644
        %v1665 = vpack.c.b16 %v1662, %v1661
        %v1666 = vpack.c.b16 %v1664, %v1663
        %v1670 = vsel %vm491, %v1656, 0
        %1672 = vmatprep.subr.bf16.mxu0 0
        %1673 = vmatpush1.bf16.msra.mxu0 %v1665
        %1674 = vmatprep.subr.bf16.mxu0 0
        %1675 = vmatpush1.bf16.msra.mxu0 %v1666
        %1676 = vmatprep.subr.bf16.mxu0 0
        %1677 = vmatpush1.bf16.msra.mxu0 0
        %1678 = vmatprep.subr.bf16.mxu0 0
        %1679 = vmatpush1.bf16.msra.mxu0 0
        %1680 = vmatprep.subr.bf16.mxu0 0
        %1681 = vmatpush1.bf16.msra.mxu0 0
        %1682 = vmatprep.subr.bf16.mxu0 0
        %1683 = vmatpush1.bf16.msra.mxu0 0
        %1684 = vmatprep.subr.bf16.mxu0 0
        %1685 = vmatpush1.bf16.msra.mxu0 0
        %1686 = vmatprep.subr.bf16.mxu0 0
        %1687 = vmatpush1.bf16.msra.mxu0 0
        %1688 = vmatprep.subr.bf16.mxu0 0
        %1689 = vmatpush1.bf16.msra.mxu0 0
        %1690 = vmatprep.subr.bf16.mxu0 0
        %1691 = vmatpush1.bf16.msra.mxu0 0
        %1692 = vmatprep.subr.bf16.mxu0 0
        %1693 = vmatpush1.bf16.msra.mxu0 0
        %1694 = vmatprep.subr.bf16.mxu0 0
        %1695 = vmatpush1.bf16.msra.mxu0 0
        %1696 = vmatprep.subr.bf16.mxu0 0
        %1697 = vmatpush1.bf16.msra.mxu0 0
        %1698 = vmatprep.subr.bf16.mxu0 0
        %1699 = vmatpush1.bf16.msra.mxu0 0
        %1700 = vmatprep.subr.bf16.mxu0 0
        %1701 = vmatpush1.bf16.msra.mxu0 0
        %1702 = vmatprep.subr.bf16.mxu0 0
        %1703 = vmatpush1.bf16.msra.mxu0 0
        %1704 = vmatprep.mubr.bf16.mxu0 0
        %1705 = vmatmul.mubr.bf16.gmra.mrb[0].mxu0 %v1670
        %v1706 = vpop.f32.mrb[0].mxu0
        %v1707 = vadd.f32 %v1650, %v1706
        %v1708 = vpop.f32.mrb[0].mxu0
        %v1709 = vpop.f32.mrb[0].mxu0
        %v1710 = vadd.f32 %v1650, %v1709
        %v1711 = vpop.f32.mrb[0].mxu0
        %1712 = vdwg.mxu0
        %v1713 = vpack.c.bf16 %v1710, %v1707
        %v1714 = vmul.bf16 %v1713, 1071267802
        %v1715 = vxor.u32 %v1714, 2147516416
        %v1717 = vmul.bf16 %v1715, 1069105081
        %v1718 = vpow.bf16.pop %v1717
        %v1719 = vadd.bf16 %v1718, 1065369472
        %v1720 = vrcp.bf16.pop %v1719
        %v1721 = vmul.bf16 1065369472, %v1720
        %v1722 = vmul.bf16 %v1713, %v1721
        %v1723 = vld [vmem:[%s472] sm:$0xf]
        %v1724 = vld [vmem:[%s472 + $0x4] sm:$0xf]
        %v1725 = vld [vmem:[%s472 + $0x8] sm:$0xf]
        %v1726 = vld [vmem:[%s472 + $0xc] sm:$0xf]
        %v1727 = vld [vmem:[%s472 + $0x10] sm:$0xf]
        %v1728 = vld [vmem:[%s472 + $0x14] sm:$0xf]
        %v1729 = vld [vmem:[%s472 + $0x18] sm:$0xf]
        %v1730 = vld [vmem:[%s472 + $0x1c] sm:$0xf]
        %v1731 = vld [vmem:[%s472 + $0x20] sm:$0xf]
        %v1732 = vld [vmem:[%s472 + $0x24] sm:$0xf]
        %v1733 = vld [vmem:[%s472 + $0x28] sm:$0xf]
        %v1734 = vld [vmem:[%s472 + $0x2c] sm:$0xf]
        %v1735 = vld [vmem:[%s472 + $0x30] sm:$0xf]
        %v1736 = vld [vmem:[%s472 + $0x34] sm:$0xf]
        %v1737 = vld [vmem:[%s472 + $0x38] sm:$0xf]
        %v1738 = vld [vmem:[%s472 + $0x3c] sm:$0xf]
        %v1739 = vld [vmem:[%s475] sm:$0x1]
        %v1741 = vlaneseq
        %v1742 = vshrl.u32 %v1741, 7
        %v1743 = vsub.s32 0, %v1742
        %v1744 = vrot.slane %v1739, %v1743
        %v1762 = vunpack.c.l.b16 %v1723
        %v1763 = vunpack.c.l.b16 %v1724
        %v1764 = vunpack.c.l.b16 %v1725
        %v1765 = vunpack.c.l.b16 %v1726
        %v1766 = vunpack.c.l.b16 %v1727
        %v1767 = vunpack.c.l.b16 %v1728
        %v1768 = vunpack.c.l.b16 %v1729
        %v1769 = vunpack.c.l.b16 %v1730
        %v1770 = vunpack.c.l.b16 %v1731
        %v1771 = vunpack.c.l.b16 %v1732
        %v1772 = vunpack.c.l.b16 %v1733
        %v1773 = vunpack.c.l.b16 %v1734
        %v1774 = vunpack.c.l.b16 %v1735
        %v1775 = vunpack.c.l.b16 %v1736
        %v1776 = vunpack.c.l.b16 %v1737
        %v1777 = vunpack.c.l.b16 %v1738
        %v1778 = vpack.c.b16 %v1763, %v1762
        %v1779 = vpack.c.b16 %v1765, %v1764
        %v1780 = vpack.c.b16 %v1767, %v1766
        %v1781 = vpack.c.b16 %v1769, %v1768
        %v1782 = vpack.c.b16 %v1771, %v1770
        %v1783 = vpack.c.b16 %v1773, %v1772
        %v1784 = vpack.c.b16 %v1775, %v1774
        %v1785 = vpack.c.b16 %v1777, %v1776
        %1794 = vmatprep.subr.bf16.mxu0 0
        %1795 = vmatpush1.bf16.msra.mxu0 %v1778
        %1796 = vmatprep.subr.bf16.mxu0 0
        %1797 = vmatpush1.bf16.msra.mxu0 %v1779
        %1798 = vmatprep.subr.bf16.mxu0 0
        %1799 = vmatpush1.bf16.msra.mxu0 %v1780
        %1800 = vmatprep.subr.bf16.mxu0 0
        %1801 = vmatpush1.bf16.msra.mxu0 %v1781
        %1802 = vmatprep.subr.bf16.mxu0 0
        %1803 = vmatpush1.bf16.msra.mxu0 %v1782
        %1804 = vmatprep.subr.bf16.mxu0 0
        %1805 = vmatpush1.bf16.msra.mxu0 %v1783
        %1806 = vmatprep.subr.bf16.mxu0 0
        %1807 = vmatpush1.bf16.msra.mxu0 %v1784
        %1808 = vmatprep.subr.bf16.mxu0 0
        %1809 = vmatpush1.bf16.msra.mxu0 %v1785
        %1810 = vmatprep.subr.bf16.mxu0 0
        %1811 = vmatpush1.bf16.msra.mxu0 0
        %1812 = vmatprep.subr.bf16.mxu0 0
        %1813 = vmatpush1.bf16.msra.mxu0 0
        %1814 = vmatprep.subr.bf16.mxu0 0
        %1815 = vmatpush1.bf16.msra.mxu0 0
        %1816 = vmatprep.subr.bf16.mxu0 0
        %1817 = vmatpush1.bf16.msra.mxu0 0
        %1818 = vmatprep.subr.bf16.mxu0 0
        %1819 = vmatpush1.bf16.msra.mxu0 0
        %1820 = vmatprep.subr.bf16.mxu0 0
        %1821 = vmatpush1.bf16.msra.mxu0 0
        %1822 = vmatprep.subr.bf16.mxu0 0
        %1823 = vmatpush1.bf16.msra.mxu0 0
        %1824 = vmatprep.subr.bf16.mxu0 0
        %1825 = vmatpush1.bf16.msra.mxu0 0
        %1826 = vmatprep.mubr.bf16.mxu0 0
        %1827 = vmatmul.mubr.bf16.gmra.mrb[0].mxu0 %v1722
        %v1828 = vpop.f32.mrb[0].mxu0
        %v1829 = vadd.f32 %v1744, %v1828
        %v1830 = vpop.f32.mrb[0].mxu0
        %v1831 = vpop.f32.mrb[0].mxu0
        %v1832 = vadd.f32 %v1744, %v1831
        %v1833 = vpop.f32.mrb[0].mxu0
        %1834 = vdwg.mxu0
        %v1835 = vadd.f32 %v1611, %v1829
        %v1836 = vadd.f32 %v1612, %v1832
        %1837 = vst.msk [vmem:[#allocation2] sm:$0xff] %vm491, %v1835
        %1838 = vst.msk [vmem:[#allocation2 + $0x8] sm:$0xff] %vm491, %v1836
        %p1839 = scmp.eq.s32.totalorder %s27, 1
        // Predicated region
        $region65: #{tpu_custom_call.1} parent=55 // pred_check
          %p1840 = pneg %p1839
        $region66: #{tpu_custom_call.1} parent=55 // pred_check_branch
          %1842 = sbr.rel (%p1840) target = $region68
        $region67: #{tpu_custom_call.1} parent=55 // pred_region
          %1843 = vst.msk [vmem:[#allocation6] sm:$0xff] %vm491, %v1835
          %1844 = vst.msk [vmem:[#allocation6 + $0x8] sm:$0xff] %vm491, %v1836
        $region68: #{tpu_custom_call.1} parent=55 // pred_fallthru
          _
        // Predicated region
        $region69: #{tpu_custom_call.1} parent=55 // pred_check
          %p1845 = pneg %p286
        $region70: #{tpu_custom_call.1} parent=55 // pred_check_branch
          %1847 = sbr.rel (%p1845) target = $region72
        $region71: #{tpu_custom_call.1} parent=55 // pred_region
          %s1848 = smul.u32 2, %s26
          %s1850 = ssub.s32 256, 256
          %1851 = vsyncadd [#allocation5], %s1850
          %s1852 = smul.addr %s1848, 128
          %s1853 = scalar_lea.hbm %s9, %s1852
          %s1854 = sshll.u32 [#allocation6], 4
          %s1855 = int_to_ptr.vmem [resolvable:$true] %s1854
          %1860 = dma.vmem_to_hbm [thread:$0]  %s1855, 256, %s1853, [#allocation5], 128, 128, 8
        $region72: #{tpu_custom_call.1} parent=55 // pred_fallthru
          _
        // Predicated region
        $region73: #{tpu_custom_call.1} parent=55 // pred_check
          %p1861 = pneg %p286
        $region74: #{tpu_custom_call.1} parent=55 // pred_check_branch
          %1863 = sbr.rel (%p1861) target = $region76
        $region75: #{tpu_custom_call.1} parent=55 // pred_region
          %1864 = dma.done [#allocation5], 256
        $region76: #{tpu_custom_call.1} parent=55 // pred_fallthru
          _
      $region56: #{tpu_custom_call.1} parent=5 // pred_fallthru
        _
      %p1865 = scmp.le.s32.totalorder 2, %s17
      // Predicated region
      $region77: #{tpu_custom_call.1} parent=5 // pred_check
        %p1866 = pneg %p1865
      $region78: #{tpu_custom_call.1} parent=5 // pred_check_branch
        %1868 = sbr.rel (%p1866) target = $region80
      $region79: #{tpu_custom_call.1} parent=5 // pred_region
        %s1869 = ssub.s32 %s17, 2
      $region80: #{tpu_custom_call.1} parent=5 // pred_fallthru
        _
    $region6: #{tpu_custom_call.1} parent=1 // loop_footer
      %s21 = sadd.s32 1, %s17
    $region7: #{tpu_custom_call.1} parent=1 // loop_footer_branch
      %16 = sbr.rel target = $region3
    $region8: #{tpu_custom_call.1} parent=1 // loop_exit
      _
    %1870 = vsyncpa [#allocation4], 1
    %s1871 = scalar_lea.sflag [#allocation4], 1
    %1872 = vsyncpa %s1871, 1
    %1873 = vsyncpa [#allocation5], 1
    %s1874 = scalar_lea.sflag [#allocation5], 1
    %1875 = vsyncpa %s1874, 1

</llo_original>
